<compile_context>
chip_gen: v7x
topology: tpu7x:2x2x1
jax: 0.10.0
libtpu: 0.0.40
codegen_flags: <defaults>
</compile_context>

<pallas_src>
import functools

import jax
import jax.numpy as jnp
from jax.experimental import pallas as pl
from jax.experimental.pallas import tpu as pltpu


# ----------------------------------------------------------------------------
# Kernels
# ----------------------------------------------------------------------------
def _snake_kernel_resident(x_ref, w_ref, b_ref, o_ref, *, omega_0):
    """Full-K path: weight resident in VMEM, single fused step per row tile."""
    y = jnp.dot(x_ref[...], w_ref[...], preferred_element_type=jnp.float32)
    y = y + b_ref[...].astype(jnp.float32)          # (1, M) broadcasts over rows
    inv_omega = 1.0 / omega_0
    o_ref[...] = (y - jnp.cos(omega_0 * y) * inv_omega + inv_omega).astype(o_ref.dtype)


def _snake_kernel_ktiled(x_ref, w_ref, b_ref, o_ref, acc_ref, *, omega_0):
    """K-streamed fallback: f32 accumulator, bias folded into the k==0 init."""
    k = pl.program_id(1)

    @pl.when(k == 0)
    def _():
        acc_ref[...] = jnp.broadcast_to(b_ref[...].astype(jnp.float32), acc_ref.shape)

    acc_ref[...] += jnp.dot(x_ref[...], w_ref[...], preferred_element_type=jnp.float32)

    @pl.when(k == pl.num_programs(1) - 1)
    def _():
        y = acc_ref[...]
        inv_omega = 1.0 / omega_0
        o_ref[...] = (y - jnp.cos(omega_0 * y) * inv_omega + inv_omega).astype(o_ref.dtype)


# ----------------------------------------------------------------------------
# Tiling helpers
# ----------------------------------------------------------------------------
def _round_up(v, m):
    return -(-v // m) * m


def _vmem_budget_bytes():
    """Generation-aware VMEM budget with headroom for Mosaic internals."""
    try:
        cap = int(pltpu.get_tpu_info().vmem_capacity_bytes)
    except Exception:
        cap = 64 * 2**20                      # conservative (v7x-sized) default
    # 128 MiB (v5e/v6e) -> 112 MiB budget; 64 MiB (v7x) -> 56 MiB budget.
    return cap - max(8 * 2**20, cap // 8)


def _pick_tile_n(n_rows, per_row_bytes, fixed_bytes, budget):
    avail = budget - fixed_bytes
    tile_n = (avail // per_row_bytes) // 8 * 8 if avail > 0 else 8
    tile_n = int(max(8, min(tile_n, 4096)))
    if tile_n >= n_rows:
        if n_rows >= 16:
            # Keep >= 2 row tiles so the "parallel" axis can feed both
            # TensorCores on v7x (negligible cost on single-TC v5e/v6e).
            tile_n = _round_up(-(-n_rows // 2), 8)
        else:
            tile_n = n_rows                   # full-extent block (always legal)
    return tile_n


# ----------------------------------------------------------------------------
# Wrapper
# ----------------------------------------------------------------------------
def snake_layer(x, w_km, bias, omega_0=30.0, *, tile_n=None, tile_k=None):
    """SnakeLayer forward.

    x:    [..., input_dim]
    w_km: [input_dim, output_dim]  (PyTorch `linear.weight.T`, transposed ONCE
          at parameter-load time; keeps the MXU RHS K-major -> no XLU work)
    bias: [output_dim]
    """
    *lead, input_dim = x.shape
    assert w_km.shape[0] == input_dim, "w_km must be [input_dim, output_dim]"
    output_dim = w_km.shape[1]

    x2 = x.reshape(-1, input_dim)
    n_rows = x2.shape[0]

    xb = jnp.dtype(x.dtype).itemsize
    wb = jnp.dtype(w_km.dtype).itemsize
    ob = xb

    # Lane-dense output: pad M to a multiple of 128 (pad columns produce exactly
    # 0 under the snake activation and are sliced off below).
    m_pad = _round_up(output_dim, 128)
    if m_pad != output_dim:
        w_km = jnp.pad(w_km, ((0, 0), (0, m_pad - output_dim)))
        bias = jnp.pad(bias, (0, m_pad - output_dim))
    b2d = bias.reshape(1, m_pad)

    budget = _vmem_budget_bytes()
    cost = pl.CostEstimate(
        flops=2 * n_rows * input_dim * output_dim,
        transcendentals=n_rows * output_dim,
        bytes_accessed=(n_rows * input_dim * xb
                        + input_dim * m_pad * wb
                        + m_pad * wb
                        + n_rows * m_pad * ob),
    )

    # Resident-weight path whenever the (double-buffer-counted) weight leaves
    # enough room for useful row tiles; explicit tile_k forces the streamed path.
    w_resident_bytes = 2 * input_dim * m_pad * wb
    use_resident = (tile_k is None) and (w_resident_bytes <= (budget * 3) // 5)

    if use_resident:
        fixed = w_resident_bytes + 2 * m_pad * 4
        per_row = 2 * input_dim * xb + 2 * m_pad * ob
        tn = tile_n if tile_n is not None else _pick_tile_n(n_rows, per_row, fixed, budget)
        out2 = pl.pallas_call(
            functools.partial(_snake_kernel_resident, omega_0=float(omega_0)),
            out_shape=jax.ShapeDtypeStruct((n_rows, m_pad), x.dtype),
            grid_spec=pltpu.PrefetchScalarGridSpec(
                num_scalar_prefetch=0,
                grid=(pl.cdiv(n_rows, tn),),
                in_specs=[
                    pl.BlockSpec((tn, input_dim), lambda i: (i, 0)),      # x rows
                    pl.BlockSpec((input_dim, m_pad), lambda i: (0, 0)),   # resident weight
                    pl.BlockSpec((1, m_pad), lambda i: (0, 0)),           # resident bias
                ],
                out_specs=pl.BlockSpec((tn, m_pad), lambda i: (i, 0)),
            ),
            compiler_params=pltpu.CompilerParams(
                dimension_semantics=("parallel",),
                vmem_limit_bytes=int(budget),
            ),
            cost_estimate=cost,
        )(x2, w_km, b2d)
    else:
        # K-streamed fallback.  tile_k MUST divide input_dim exactly so no
        # undefined out-of-bounds K columns are ever accumulated.
        if tile_k is None:
            tile_k = input_dim
            for cand in (2048, 1024, 512, 256, 128):   # prefer >=256 (MXU depth)
                if input_dim % cand == 0 and 2 * cand * m_pad * wb <= (budget * 2) // 5:
                    tile_k = cand
                    break
        if input_dim % tile_k != 0 or (tile_k % 128 != 0 and tile_k != input_dim):
            raise ValueError(
                f"tile_k={tile_k} must divide input_dim={input_dim} and be a multiple of 128")
        fixed = 2 * tile_k * m_pad * wb + 2 * m_pad * 4
        per_row = 2 * tile_k * xb + 2 * m_pad * ob + m_pad * 4   # + f32 acc scratch
        tn = tile_n if tile_n is not None else _pick_tile_n(n_rows, per_row, fixed, budget)
        out2 = pl.pallas_call(
            functools.partial(_snake_kernel_ktiled, omega_0=float(omega_0)),
            out_shape=jax.ShapeDtypeStruct((n_rows, m_pad), x.dtype),
            grid_spec=pltpu.PrefetchScalarGridSpec(
                num_scalar_prefetch=0,
                grid=(pl.cdiv(n_rows, tn), input_dim // tile_k),
                in_specs=[
                    pl.BlockSpec((tn, tile_k), lambda i, k: (i, k)),      # x K slice
                    pl.BlockSpec((tile_k, m_pad), lambda i, k: (k, 0)),   # weight K slice
                    pl.BlockSpec((1, m_pad), lambda i, k: (0, 0)),        # resident bias
                ],
                out_specs=pl.BlockSpec((tn, m_pad), lambda i, k: (i, 0)),
                scratch_shapes=[pltpu.VMEM((tn, m_pad), jnp.float32)],
            ),
            compiler_params=pltpu.CompilerParams(
                dimension_semantics=("parallel", "arbitrary"),
                vmem_limit_bytes=int(budget),
            ),
            cost_estimate=cost,
        )(x2, w_km, b2d)

    if m_pad != output_dim:
        out2 = out2[:, :output_dim]
    return out2.reshape(*lead, output_dim)


def init_snake_params(key, input_dim, output_dim, is_first_layer=False, omega_0=30.0):
    """Init matching SnakeLayer.init_weights; weight returned in [K, M] layout."""
    kw, kb = jax.random.split(key)
    if is_first_layer:
        bound = 1.0 / input_dim
    else:
        bound = float(jnp.sqrt(3.0 / input_dim)) / omega_0
    w_km = jax.random.uniform(
        kw, (input_dim, output_dim), minval=-bound, maxval=bound, dtype=jnp.float32)
    # PyTorch Linear default bias init: U(-1/sqrt(fan_in), 1/sqrt(fan_in))
    b_bound = 1.0 / float(jnp.sqrt(input_dim))
    bias = jax.random.uniform(
        kb, (output_dim,), minval=-b_bound, maxval=b_bound, dtype=jnp.float32)
    return w_km, bias


def _reference(x, w_km, bias, omega_0):
    y = x @ w_km + bias
    return y - jnp.cos(omega_0 * y) / omega_0 + 1.0 / omega_0


if __name__ == "__main__":
    key = jax.random.PRNGKey(0)
    k_x, k_p, k_x2, k_p2 = jax.random.split(key, 4)
    omega_0 = 30.0

    # ---- Test 1: primary resident-weight path -------------------------------
    batch, seq, input_dim, output_dim = 2, 128, 256, 128
    x = jax.random.normal(k_x, (batch, seq, input_dim), dtype=jnp.float32)
    w_km, bias = init_snake_params(k_p, input_dim, output_dim,
                                   is_first_layer=True, omega_0=omega_0)
    out = jax.block_until_ready(snake_layer(x, w_km, bias, omega_0=omega_0))
    ref = _reference(x, w_km, bias, omega_0)
    assert out.shape == (batch, seq, output_dim)
    assert jnp.allclose(out, ref, atol=1e-4, rtol=1e-3), "resident path mismatch"

    # ---- Test 2: K-streamed fallback (forced) exercising acc + bias init ----
    out_s = jax.block_until_ready(
        snake_layer(x, w_km, bias, omega_0=omega_0, tile_n=128, tile_k=128))
    assert jnp.allclose(out_s, ref, atol=1e-4, rtol=1e-3), "streamed path mismatch"

    # ---- Test 3: non-multiple-of-128 output_dim (lane padding + slice) ------
    in2, out2_dim = 64, 96
    x3 = jax.random.normal(k_x2, (2, 8, in2), dtype=jnp.float32)
    w_km3, bias3 = init_snake_params(k_p2, in2, out2_dim,
                                     is_first_layer=False, omega_0=omega_0)
    out3 = jax.block_until_ready(snake_layer(x3, w_km3, bias3, omega_0=omega_0))
    ref3 = _reference(x3, w_km3, bias3, omega_0)
    assert out3.shape == (2, 8, out2_dim)
    assert jnp.allclose(out3, ref3, atol=1e-4, rtol=1e-3), "padded path mismatch"

    print("KERNEL_OK")
</pallas_src>

<mosaic_0001>
module attributes {stable_mosaic.version = 11 : i64} {
  func.func @_snake_kernel_resident(%arg0: i32, %arg1: memref<128x256xf32, #tpu.memory_space<vmem>>, %arg2: memref<256x128xf32, #tpu.memory_space<vmem>>, %arg3: memref<1x128xf32, #tpu.memory_space<vmem>>, %arg4: memref<128x128xf32, #tpu.memory_space<vmem>>) attributes {dimension_semantics = [#tpu.dimension_semantics<parallel>], iteration_bounds = array<i64: 2>, scalar_prefetch = 0 : i64, scratch_operands = 0 : i64, tpu.core_type = #tpu.core_type<tc>, window_params = [{transform_indices = @transform_0, window_bounds = array<i64: 128, 256>}, {pipeline_mode = #tpu.pipeline_mode<synchronous>, transform_indices = @transform_1, window_bounds = array<i64: 256, 128>}, {pipeline_mode = #tpu.pipeline_mode<synchronous>, transform_indices = @transform_2, window_bounds = array<i64: 1, 128>}, {transform_indices = @transform_3, window_bounds = array<i64: 128, 128>}]} {
    %c0 = arith.constant 0 : index
    %c0_0 = arith.constant 0 : index
    %0 = vector.load %arg1[%c0, %c0_0] : memref<128x256xf32, #tpu.memory_space<vmem>>, vector<128x256xf32>
    %c0_1 = arith.constant 0 : index
    %c0_2 = arith.constant 0 : index
    %1 = vector.load %arg2[%c0_1, %c0_2] : memref<256x128xf32, #tpu.memory_space<vmem>>, vector<256x128xf32>
    %cst = arith.constant dense<0.000000e+00> : vector<128x128xf32>
    %2 = tpu.matmul %0, %1, %cst {dimension_numbers = #tpu.dot_dimension_numbers<[1], [0], [0], [1], [0, 0, 1, 1], [], []>} : vector<128x256xf32>, vector<256x128xf32>, vector<128x128xf32> -> vector<128x128xf32>
    %c0_3 = arith.constant 0 : index
    %c0_4 = arith.constant 0 : index
    %3 = vector.load %arg3[%c0_3, %c0_4] : memref<1x128xf32, #tpu.memory_space<vmem>>, vector<1x128xf32>
    %4 = vector.broadcast %3 : vector<1x128xf32> to vector<128x128xf32>
    %5 = arith.addf %2, %4 : vector<128x128xf32>
    %cst_5 = arith.constant 3.000000e+01 : f32
    %6 = vector.broadcast %cst_5 : f32 to vector<128x128xf32>
    %7 = arith.mulf %6, %5 : vector<128x128xf32>
    %8 = math.cos %7 : vector<128x128xf32>
    %cst_6 = arith.constant 0.0333333351 : f32
    %9 = vector.broadcast %cst_6 : f32 to vector<128x128xf32>
    %10 = arith.mulf %8, %9 : vector<128x128xf32>
    %11 = arith.subf %5, %10 : vector<128x128xf32>
    %cst_7 = arith.constant 0.0333333351 : f32
    %12 = vector.broadcast %cst_7 : f32 to vector<128x128xf32>
    %13 = arith.addf %11, %12 : vector<128x128xf32>
    %c0_8 = arith.constant 0 : index
    %c0_9 = arith.constant 0 : index
    %14 = vector.load %arg4[%c0_8, %c0_9] : memref<128x128xf32, #tpu.memory_space<vmem>>, vector<128x128xf32>
    tpu.vector_store %arg4[%c0_8, %c0_9], %13 {strides = array<i32>} : memref<128x128xf32, #tpu.memory_space<vmem>>, vector<128x128xf32>,
    return
  }
  func.func @transform_0(%arg0: i32) -> (i32, i32) {
    %c0_i32 = arith.constant 0 : i32
    %c0_i32_0 = arith.constant 0 : i32
    return %arg0, %c0_i32 : i32, i32
  }
  func.func @transform_1(%arg0: i32) -> (i32, i32) {
    %c0_i32 = arith.constant 0 : i32
    %c0_i32_0 = arith.constant 0 : i32
    %c0_i32_1 = arith.constant 0 : i32
    return %c0_i32, %c0_i32_0 : i32, i32
  }
  func.func @transform_2(%arg0: i32) -> (i32, i32) {
    %c0_i32 = arith.constant 0 : i32
    %c0_i32_0 = arith.constant 0 : i32
    %c0_i32_1 = arith.constant 0 : i32
    return %c0_i32, %c0_i32_0 : i32, i32
  }
  func.func @transform_3(%arg0: i32) -> (i32, i32) {
    %c0_i32 = arith.constant 0 : i32
    %c0_i32_0 = arith.constant 0 : i32
    return %arg0, %c0_i32 : i32, i32
  }
}

</mosaic_0001>

<llo_original>
// kernel: tpu_custom_call.1
$region0: #{tpu_custom_call.1}
  #allocation0 [shape = 'u32[]', space=smem, size = 0x4, offset = 0x4, fixed_abs, tag = 'smem constant byte address 0x4 - core index']
  #allocation1 [shape = 'u32[144,128]{1,0:T(1,128)}', space=vmem, size = 0x12000, scoped, tag = 'internal scratch']
  %s0 = inlined_call_operand.hbm [shape: f32[256,256], index: 0, kind: input, shape index: {}]
  %s1 = inlined_call_operand.hbm [shape: f32[256,128], index: 1, kind: input, shape index: {}]
  %s2 = inlined_call_operand.vmem [shape: f32[1,128], index: 2, kind: input, shape index: {}]
  %s3 = inlined_call_operand.hbm [shape: f32[256,128], index: 3, kind: output, shape index: {}]
  %s4 = sld [smem:[#allocation0]]
  $region53: #{tpu_custom_call.1} parent=0
    _
  %s6 = ssub.s32 1, %s4
  %s7 = scalar_select 0, %s6, %s4
  $region1: #{tpu_custom_call.1} parent=0
    #allocation2 [shape = 'u8[262144]{0}', space=vmem, size = 0x40000, scoped, tag = 'input window, operand 0']
    #allocation3 [shape = 's32[2]{0}', space=sflag, size = 0x8, scoped, tag = 'scoped memory for tpu_custom_call.1']
    #allocation4 [shape = 's32[2]{0}', space=sflag, size = 0x8, scoped, tag = 'scoped memory for tpu_custom_call.1']
    #allocation5 [shape = 'u8[131072]{0}', space=vmem, size = 0x20000, scoped, tag = 'input window, operand 1, single buffered']
    #allocation6 [shape = 's32[1]{0}', space=sflag, size = 0x4, scoped, tag = 'scoped memory for tpu_custom_call.1']
    #allocation7 [shape = 'u8[131072]{0}', space=vmem, size = 0x20000, scoped, tag = 'output window, operand 0']
    %8 = vsyncpa [#allocation3], 0
    %s9 = scalar_lea.sflag [#allocation3], 1
    %10 = vsyncpa %s9, 0
    %11 = vsyncpa [#allocation6], 0
    %12 = vsyncpa [#allocation4], 0
    %s13 = scalar_lea.sflag [#allocation4], 1
    %14 = vsyncpa %s13, 0
    loop: start=0, step=1, limit=4
    $region2: #{tpu_custom_call.1} parent=1 // loop_pre_header
      _
    $region3: #{tpu_custom_call.1} parent=1 // loop_header
      %s16 = sphi 0, %s20
      %p17 = scmp.ge.s32.totalorder %s16, 4
      %s26 = sphi 0, %s28
      %s29 = sphi 0, %s26
      %s30 = sphi 0, %s29
      %s46 = sphi 0, %s30
      %s50 = sphi 0, %s50
      %s52 = sphi 0, %s50
      %s53 = sphi 0, %s52
      %s67 = sphi 0, %s53
      %s71 = sphi 0, %s71
      %s73 = sphi 0, %s71
      %s74 = sphi 0, %s73
      %s88 = sphi 0, %s74
      %s94 = sphi 0, %s96
      %s97 = sphi 0, %s94
      %s98 = sphi 0, %s97
      %s114 = sphi 0, %s98
    $region4: #{tpu_custom_call.1} parent=1 // loop_header_branch
      %19 = sbr.rel (%p17) target = $region8
    $region5: #{tpu_custom_call.1} parent=1 // loop_body
      %s21 = ssub.s32 %s16, 1
      %s22 = ssub.s32 %s16, 2
      %s23 = sadd.s32 %s16, 1
      %s24 = ssub.s32 %s16, %s23
      %p25 = scmp.eq.s32.totalorder %s24, 0
      %s27 = sadd.s32 %s26, 1
      %s28 = scalar_select %p25, %s26, %s27
      %p31 = pneg %p25
      %p32 = scmp.eq.s32.totalorder %s16, 1
      %p33 = por %p31, %p32
      %p34 = scmp.ne.s32.totalorder %s26, %s29
      %p35 = scmp.eq.s32.totalorder %s16, 0
      %p36 = por %p34, %p35
      %p37 = scmp.ne.s32.totalorder %s26, %s29
      %p38 = scmp.eq.s32.totalorder %s21, 1
      %p39 = por %p37, %p38
      %p40 = scmp.ne.s32.totalorder %s29, %s30
      %p41 = scmp.eq.s32.totalorder %s21, 0
      %p42 = por %p40, %p41
      %p43 = scmp.ne.s32.totalorder %s29, %s30
      %p44 = scmp.eq.s32.totalorder %s22, 1
      %p45 = por %p43, %p44
      %p47 = scmp.ne.s32.totalorder %s30, %s46
      %p48 = scmp.eq.s32.totalorder %s22, 0
      %p49 = por %p47, %p48
      %s51 = sadd.s32 %s50, 1
      %p54 = scmp.eq.s32.totalorder %s16, 1
      %p55 = scmp.ne.s32.totalorder %s50, %s52
      %p56 = scmp.eq.s32.totalorder %s16, 0
      %p57 = por %p55, %p56
      %p58 = scmp.ne.s32.totalorder %s50, %s52
      %p59 = scmp.eq.s32.totalorder %s21, 1
      %p60 = por %p58, %p59
      %p61 = scmp.ne.s32.totalorder %s52, %s53
      %p62 = scmp.eq.s32.totalorder %s21, 0
      %p63 = por %p61, %p62
      %p64 = scmp.ne.s32.totalorder %s52, %s53
      %p65 = scmp.eq.s32.totalorder %s22, 1
      %p66 = por %p64, %p65
      %p68 = scmp.ne.s32.totalorder %s53, %s67
      %p69 = scmp.eq.s32.totalorder %s22, 0
      %p70 = por %p68, %p69
      %s72 = sadd.s32 %s71, 1
      %p75 = scmp.eq.s32.totalorder %s16, 1
      %p76 = scmp.ne.s32.totalorder %s71, %s73
      %p77 = scmp.eq.s32.totalorder %s16, 0
      %p78 = por %p76, %p77
      %p79 = scmp.ne.s32.totalorder %s71, %s73
      %p80 = scmp.eq.s32.totalorder %s21, 1
      %p81 = por %p79, %p80
      %p82 = scmp.ne.s32.totalorder %s73, %s74
      %p83 = scmp.eq.s32.totalorder %s21, 0
      %p84 = por %p82, %p83
      %p85 = scmp.ne.s32.totalorder %s73, %s74
      %p86 = scmp.eq.s32.totalorder %s22, 1
      %p87 = por %p85, %p86
      %p89 = scmp.ne.s32.totalorder %s74, %s88
      %p90 = scmp.eq.s32.totalorder %s22, 0
      %p91 = por %p89, %p90
      %s92 = ssub.s32 %s16, %s23
      %p93 = scmp.eq.s32.totalorder %s92, 0
      %s95 = sadd.s32 %s94, 1
      %s96 = scalar_select %p93, %s94, %s95
      %p99 = pneg %p93
      %p100 = scmp.eq.s32.totalorder %s16, 1
      %p101 = por %p99, %p100
      %p102 = scmp.ne.s32.totalorder %s94, %s97
      %p103 = scmp.eq.s32.totalorder %s16, 0
      %p104 = por %p102, %p103
      %p105 = scmp.ne.s32.totalorder %s94, %s97
      %p106 = scmp.eq.s32.totalorder %s21, 1
      %p107 = por %p105, %p106
      %p108 = scmp.ne.s32.totalorder %s97, %s98
      %p109 = scmp.eq.s32.totalorder %s21, 0
      %p110 = por %p108, %p109
      %p111 = scmp.ne.s32.totalorder %s97, %s98
      %p112 = scmp.eq.s32.totalorder %s22, 1
      %p113 = por %p111, %p112
      %p115 = scmp.ne.s32.totalorder %s98, %s114
      %p116 = scmp.eq.s32.totalorder %s22, 0
      %p117 = por %p115, %p116
      %p118 = scmp.le.s32.totalorder 1, %s16
      %p119 = scmp.lt.s32.totalorder %s16, 3
      %p120 = pnand %p118, %p119
      %p121 = pneg %p120
      // Predicated region
      $region9: #{tpu_custom_call.1} parent=5 // pred_check
        _
      $region10: #{tpu_custom_call.1} parent=5 // pred_check_branch
        %123 = sbr.rel (%p120) target = $region12
      $region11: #{tpu_custom_call.1} parent=5 // pred_region
        %s124 = ssub.s32 %s16, 1
        // Predicated region
        $region13: #{tpu_custom_call.1} parent=11 // pred_check
          %p125 = pneg %p63
        $region14: #{tpu_custom_call.1} parent=11 // pred_check_branch
          %127 = sbr.rel (%p125) target = $region16
        $region15: #{tpu_custom_call.1} parent=11 // pred_region
          %s129 = ssub.s32 4096, 4096
          %130 = vsyncadd [#allocation6], %s129
          %s131 = sshll.u32 [#allocation5], 4
          %s132 = int_to_ptr.vmem [resolvable:$true] %s131
          %137 = dma.hbm_to_vmem [thread:$0]  %s1, 4096, %s132, [#allocation6], 128, 128, 8
        $region16: #{tpu_custom_call.1} parent=11 // pred_fallthru
          _
        // Predicated region
        $region17: #{tpu_custom_call.1} parent=11 // pred_check
          %p138 = pneg %p84
        $region18: #{tpu_custom_call.1} parent=11 // pred_check_branch
          %140 = sbr.rel (%p138) target = $region20
        $region19: #{tpu_custom_call.1} parent=11 // pred_region
          _
        $region20: #{tpu_custom_call.1} parent=11 // pred_fallthru
          _
      $region12: #{tpu_custom_call.1} parent=5 // pred_fallthru
        _
      %p141 = scmp.lt.s32.totalorder %s16, 2
      // Predicated region
      $region21: #{tpu_custom_call.1} parent=5 // pred_check
        %p142 = pneg %p141
      $region22: #{tpu_custom_call.1} parent=5 // pred_check_branch
        %144 = sbr.rel (%p142) target = $region24
      $region23: #{tpu_custom_call.1} parent=5 // pred_region
        // Predicated region
        $region25: #{tpu_custom_call.1} parent=23 // pred_check
          %p145 = pneg %p36
        $region26: #{tpu_custom_call.1} parent=23 // pred_check_branch
          %147 = sbr.rel (%p145) target = $region28
        $region27: #{tpu_custom_call.1} parent=23 // pred_region
          %s148 = sand.u32 %s26, 1
          %s149 = scalar_lea.sflag [#allocation3], %s148
          %s150 = sand.u32 %s26, 1
          %s151 = smul.addr %s150, 256
          %s152 = scalar_lea.vmem [#allocation2], %s151
          %s153 = smul.u32 16, %s16
          %s155 = ssub.s32 4096, 4096
          %156 = vsyncadd %s149, %s155
          %s157 = smul.addr %s153, 2
          %s158 = smul.addr %s157, 128
          %s159 = scalar_lea.hbm %s0, %s158
          %s160 = sshll.u32 %s152, 4
          %s161 = int_to_ptr.vmem [resolvable:$true] %s160
          %166 = dma.hbm_to_vmem [thread:$0]  %s159, 4096, %s161, %s149, 256, 256, 16
        $region28: #{tpu_custom_call.1} parent=23 // pred_fallthru
          _
      $region24: #{tpu_custom_call.1} parent=5 // pred_fallthru
        _
      %p167 = scmp.le.s32.totalorder 1, %s16
      %p168 = scmp.lt.s32.totalorder %s16, 3
      %p169 = pnand %p167, %p168
      %p170 = pneg %p169
      // Predicated region
      $region29: #{tpu_custom_call.1} parent=5 // pred_check
        _
      $region30: #{tpu_custom_call.1} parent=5 // pred_check_branch
        %172 = sbr.rel (%p169) target = $region32
      $region31: #{tpu_custom_call.1} parent=5 // pred_region
        %s173 = ssub.s32 %s16, 1
        %s174 = sand.u32 %s29, 1
        %s175 = scalar_lea.sflag [#allocation3], %s174
        %s176 = sand.u32 %s29, 1
        %s177 = smul.addr %s176, 256
        %s178 = scalar_lea.vmem [#allocation2], %s177
        // Predicated region
        $region33: #{tpu_custom_call.1} parent=31 // pred_check
          %p179 = pneg %p42
        $region34: #{tpu_custom_call.1} parent=31 // pred_check_branch
          %181 = sbr.rel (%p179) target = $region36
        $region35: #{tpu_custom_call.1} parent=31 // pred_region
          %182 = dma.done %s175, 4096
        $region36: #{tpu_custom_call.1} parent=31 // pred_fallthru
          _
        // Predicated region
        $region37: #{tpu_custom_call.1} parent=31 // pred_check
          %p183 = pneg %p63
        $region38: #{tpu_custom_call.1} parent=31 // pred_check_branch
          %185 = sbr.rel (%p183) target = $region40
        $region39: #{tpu_custom_call.1} parent=31 // pred_region
          %186 = dma.done [#allocation6], 4096
        $region40: #{tpu_custom_call.1} parent=31 // pred_fallthru
          _
        %s187 = sand.u32 %s29, 1
        %s188 = scalar_lea.sflag [#allocation3], %s187
        %s189 = sand.u32 %s29, 1
        %s190 = smul.addr %s189, 256
        %s191 = scalar_lea.vmem [#allocation2], %s190
        %p192 = pneg %p42
        %p193 = pneg %p39
        %p194 = pneg %p63
        %p195 = pneg %p60
        %p196 = pneg %p84
        %p197 = pneg %p81
        %p198 = pneg %p110
        %p199 = pneg %p107
        %s200 = sand.u32 %s97, 1
        %s201 = scalar_lea.sflag [#allocation4], %s200
        %s202 = sand.u32 %s97, 1
        %s203 = smul.addr %s202, 128
        %s204 = scalar_lea.vmem [#allocation7], %s203
        %s205 = smul.u32 16, %s21
        %s206 = smul.u32 16, %s21
        %v207 = vld [vmem:[%s178] sm:$0xff]
        %v208 = vld [vmem:[%s178 + $0x8] sm:$0xff]
        %v209 = vld [vmem:[%s178 + $0x10] sm:$0xff]
        %v210 = vld [vmem:[%s178 + $0x18] sm:$0xff]
        %v211 = vld [vmem:[%s178 + $0x20] sm:$0xff]
        %v212 = vld [vmem:[%s178 + $0x28] sm:$0xff]
        %v213 = vld [vmem:[%s178 + $0x30] sm:$0xff]
        %v214 = vld [vmem:[%s178 + $0x38] sm:$0xff]
        %v215 = vld [vmem:[%s178 + $0x40] sm:$0xff]
        %v216 = vld [vmem:[%s178 + $0x48] sm:$0xff]
        %v217 = vld [vmem:[%s178 + $0x50] sm:$0xff]
        %v218 = vld [vmem:[%s178 + $0x58] sm:$0xff]
        %v219 = vld [vmem:[%s178 + $0x60] sm:$0xff]
        %v220 = vld [vmem:[%s178 + $0x68] sm:$0xff]
        %v221 = vld [vmem:[%s178 + $0x70] sm:$0xff]
        %v222 = vld [vmem:[%s178 + $0x78] sm:$0xff]
        %v223 = vld [vmem:[%s178 + $0x80] sm:$0xff]
        %v224 = vld [vmem:[%s178 + $0x88] sm:$0xff]
        %v225 = vld [vmem:[%s178 + $0x90] sm:$0xff]
        %v226 = vld [vmem:[%s178 + $0x98] sm:$0xff]
        %v227 = vld [vmem:[%s178 + $0xa0] sm:$0xff]
        %v228 = vld [vmem:[%s178 + $0xa8] sm:$0xff]
        %v229 = vld [vmem:[%s178 + $0xb0] sm:$0xff]
        %v230 = vld [vmem:[%s178 + $0xb8] sm:$0xff]
        %v231 = vld [vmem:[%s178 + $0xc0] sm:$0xff]
        %v232 = vld [vmem:[%s178 + $0xc8] sm:$0xff]
        %v233 = vld [vmem:[%s178 + $0xd0] sm:$0xff]
        %v234 = vld [vmem:[%s178 + $0xd8] sm:$0xff]
        %v235 = vld [vmem:[%s178 + $0xe0] sm:$0xff]
        %v236 = vld [vmem:[%s178 + $0xe8] sm:$0xff]
        %v237 = vld [vmem:[%s178 + $0xf0] sm:$0xff]
        %v238 = vld [vmem:[%s178 + $0xf8] sm:$0xff]
        %v239 = vld [vmem:[#allocation5] sm:$0xff]
        %v240 = vld [vmem:[#allocation5 + $0x8] sm:$0xff]
        %v241 = vld [vmem:[#allocation5 + $0x10] sm:$0xff]
        %v242 = vld [vmem:[#allocation5 + $0x18] sm:$0xff]
        %v243 = vld [vmem:[#allocation5 + $0x20] sm:$0xff]
        %v244 = vld [vmem:[#allocation5 + $0x28] sm:$0xff]
        %v245 = vld [vmem:[#allocation5 + $0x30] sm:$0xff]
        %v246 = vld [vmem:[#allocation5 + $0x38] sm:$0xff]
        %v247 = vld [vmem:[#allocation5 + $0x40] sm:$0xff]
        %v248 = vld [vmem:[#allocation5 + $0x48] sm:$0xff]
        %v249 = vld [vmem:[#allocation5 + $0x50] sm:$0xff]
        %v250 = vld [vmem:[#allocation5 + $0x58] sm:$0xff]
        %v251 = vld [vmem:[#allocation5 + $0x60] sm:$0xff]
        %v252 = vld [vmem:[#allocation5 + $0x68] sm:$0xff]
        %v253 = vld [vmem:[#allocation5 + $0x70] sm:$0xff]
        %v254 = vld [vmem:[#allocation5 + $0x78] sm:$0xff]
        %v255 = vld [vmem:[#allocation5 + $0x80] sm:$0xff]
        %v256 = vld [vmem:[#allocation5 + $0x88] sm:$0xff]
        %v257 = vld [vmem:[#allocation5 + $0x90] sm:$0xff]
        %v258 = vld [vmem:[#allocation5 + $0x98] sm:$0xff]
        %v259 = vld [vmem:[#allocation5 + $0xa0] sm:$0xff]
        %v260 = vld [vmem:[#allocation5 + $0xa8] sm:$0xff]
        %v261 = vld [vmem:[#allocation5 + $0xb0] sm:$0xff]
        %v262 = vld [vmem:[#allocation5 + $0xb8] sm:$0xff]
        %v263 = vld [vmem:[#allocation5 + $0xc0] sm:$0xff]
        %v264 = vld [vmem:[#allocation5 + $0xc8] sm:$0xff]
        %v265 = vld [vmem:[#allocation5 + $0xd0] sm:$0xff]
        %v266 = vld [vmem:[#allocation5 + $0xd8] sm:$0xff]
        %v267 = vld [vmem:[#allocation5 + $0xe0] sm:$0xff]
        %v268 = vld [vmem:[#allocation5 + $0xe8] sm:$0xff]
        %v269 = vld [vmem:[#allocation5 + $0xf0] sm:$0xff]
        %v270 = vld [vmem:[#allocation5 + $0xf8] sm:$0xff]
        %v271 = vld [vmem:[%s2] sm:$0x1]
        %v273 = vlaneseq
        %v274 = vshrl.u32 %v273, 7
        %v275 = vsub.s32 0, %v274
        %v276 = vrot.slane %v271, %v275
        %278 = vmatprep.subr.mxu0 0.0
        %279 = vmatpush1.msra.mxu0 %v239
        %280 = vmatprep.subr.mxu0 0.0
        %281 = vmatpush1.msra.mxu0 %v240
        %282 = vmatprep.subr.mxu0 0.0
        %283 = vmatpush1.msra.mxu0 %v241
        %284 = vmatprep.subr.mxu0 0.0
        %285 = vmatpush1.msra.mxu0 %v242
        %286 = vmatprep.subr.mxu0 0.0
        %287 = vmatpush1.msra.mxu0 %v243
        %288 = vmatprep.subr.mxu0 0.0
        %289 = vmatpush1.msra.mxu0 %v244
        %290 = vmatprep.subr.mxu0 0.0
        %291 = vmatpush1.msra.mxu0 %v245
        %292 = vmatprep.subr.mxu0 0.0
        %293 = vmatpush1.msra.mxu0 %v246
        %294 = vmatprep.subr.mxu0 0.0
        %295 = vmatpush1.msra.mxu0 %v247
        %296 = vmatprep.subr.mxu0 0.0
        %297 = vmatpush1.msra.mxu0 %v248
        %298 = vmatprep.subr.mxu0 0.0
        %299 = vmatpush1.msra.mxu0 %v249
        %300 = vmatprep.subr.mxu0 0.0
        %301 = vmatpush1.msra.mxu0 %v250
        %302 = vmatprep.subr.mxu0 0.0
        %303 = vmatpush1.msra.mxu0 %v251
        %304 = vmatprep.subr.mxu0 0.0
        %305 = vmatpush1.msra.mxu0 %v252
        %306 = vmatprep.subr.mxu0 0.0
        %307 = vmatpush1.msra.mxu0 %v253
        %308 = vmatprep.subr.mxu0 0.0
        %309 = vmatpush1.msra.mxu0 %v254
        %310 = vmatprep.subr.mxu0 0.0
        %311 = vmatpush1.msra.mxu0 %v255
        %312 = vmatprep.subr.mxu0 0.0
        %313 = vmatpush1.msra.mxu0 %v256
        %314 = vmatprep.subr.mxu0 0.0
        %315 = vmatpush1.msra.mxu0 %v257
        %316 = vmatprep.subr.mxu0 0.0
        %317 = vmatpush1.msra.mxu0 %v258
        %318 = vmatprep.subr.mxu0 0.0
        %319 = vmatpush1.msra.mxu0 %v259
        %320 = vmatprep.subr.mxu0 0.0
        %321 = vmatpush1.msra.mxu0 %v260
        %322 = vmatprep.subr.mxu0 0.0
        %323 = vmatpush1.msra.mxu0 %v261
        %324 = vmatprep.subr.mxu0 0.0
        %325 = vmatpush1.msra.mxu0 %v262
        %326 = vmatprep.subr.mxu0 0.0
        %327 = vmatpush1.msra.mxu0 %v263
        %328 = vmatprep.subr.mxu0 0.0
        %329 = vmatpush1.msra.mxu0 %v264
        %330 = vmatprep.subr.mxu0 0.0
        %331 = vmatpush1.msra.mxu0 %v265
        %332 = vmatprep.subr.mxu0 0.0
        %333 = vmatpush1.msra.mxu0 %v266
        %334 = vmatprep.subr.mxu0 0.0
        %335 = vmatpush1.msra.mxu0 %v267
        %336 = vmatprep.subr.mxu0 0.0
        %337 = vmatpush1.msra.mxu0 %v268
        %338 = vmatprep.subr.mxu0 0.0
        %339 = vmatpush1.msra.mxu0 %v269
        %340 = vmatprep.subr.mxu0 0.0
        %341 = vmatpush1.msra.mxu0 %v270
        %342 = vmatprep.mubr.f32.mxu0 %v208
        %343 = vmatmul.mubr.f32.gmra.mrb[0].mxu0 %v207
        %v344 = vpop.f32.mrb[0].mxu0
        %v345 = vadd.f32 %v276, %v344
        %v346 = vpop.f32.mrb[0].mxu0
        %347 = vmatprep.mubr.f32.mxu0 %v210
        %348 = vmatmul.mubr.f32.gmra.mrb[0].mxu0 %v209
        %v349 = vpop.f32.mrb[0].mxu0
        %v350 = vadd.f32 %v276, %v349
        %v351 = vpop.f32.mrb[0].mxu0
        %352 = vmatprep.mubr.f32.mxu0 %v212
        %353 = vmatmul.mubr.f32.gmra.mrb[0].mxu0 %v211
        %v354 = vpop.f32.mrb[0].mxu0
        %v355 = vadd.f32 %v276, %v354
        %v356 = vpop.f32.mrb[0].mxu0
        %357 = vmatprep.mubr.f32.mxu0 %v214
        %358 = vmatmul.mubr.f32.gmra.mrb[0].mxu0 %v213
        %v359 = vpop.f32.mrb[0].mxu0
        %v360 = vadd.f32 %v276, %v359
        %v361 = vpop.f32.mrb[0].mxu0
        %362 = vmatprep.mubr.f32.mxu0 %v216
        %363 = vmatmul.mubr.f32.gmra.mrb[0].mxu0 %v215
        %v364 = vpop.f32.mrb[0].mxu0
        %v365 = vadd.f32 %v276, %v364
        %v366 = vpop.f32.mrb[0].mxu0
        %367 = vmatprep.mubr.f32.mxu0 %v218
        %368 = vmatmul.mubr.f32.gmra.mrb[0].mxu0 %v217
        %v369 = vpop.f32.mrb[0].mxu0
        %v370 = vadd.f32 %v276, %v369
        %v371 = vpop.f32.mrb[0].mxu0
        %372 = vmatprep.mubr.f32.mxu0 %v220
        %373 = vmatmul.mubr.f32.gmra.mrb[0].mxu0 %v219
        %v374 = vpop.f32.mrb[0].mxu0
        %v375 = vadd.f32 %v276, %v374
        %v376 = vpop.f32.mrb[0].mxu0
        %377 = vmatprep.mubr.f32.mxu0 %v222
        %378 = vmatmul.mubr.f32.gmra.mrb[0].mxu0 %v221
        %v379 = vpop.f32.mrb[0].mxu0
        %v380 = vadd.f32 %v276, %v379
        %v381 = vpop.f32.mrb[0].mxu0
        %382 = vmatprep.mubr.f32.mxu0 %v224
        %383 = vmatmul.mubr.f32.gmra.mrb[0].mxu0 %v223
        %v384 = vpop.f32.mrb[0].mxu0
        %v385 = vadd.f32 %v276, %v384
        %v386 = vpop.f32.mrb[0].mxu0
        %387 = vmatprep.mubr.f32.mxu0 %v226
        %388 = vmatmul.mubr.f32.gmra.mrb[0].mxu0 %v225
        %v389 = vpop.f32.mrb[0].mxu0
        %v390 = vadd.f32 %v276, %v389
        %v391 = vpop.f32.mrb[0].mxu0
        %392 = vmatprep.mubr.f32.mxu0 %v228
        %393 = vmatmul.mubr.f32.gmra.mrb[0].mxu0 %v227
        %v394 = vpop.f32.mrb[0].mxu0
        %v395 = vadd.f32 %v276, %v394
        %v396 = vpop.f32.mrb[0].mxu0
        %397 = vmatprep.mubr.f32.mxu0 %v230
        %398 = vmatmul.mubr.f32.gmra.mrb[0].mxu0 %v229
        %v399 = vpop.f32.mrb[0].mxu0
        %v400 = vadd.f32 %v276, %v399
        %v401 = vpop.f32.mrb[0].mxu0
        %402 = vmatprep.mubr.f32.mxu0 %v232
        %403 = vmatmul.mubr.f32.gmra.mrb[0].mxu0 %v231
        %v404 = vpop.f32.mrb[0].mxu0
        %v405 = vadd.f32 %v276, %v404
        %v406 = vpop.f32.mrb[0].mxu0
        %407 = vmatprep.mubr.f32.mxu0 %v234
        %408 = vmatmul.mubr.f32.gmra.mrb[0].mxu0 %v233
        %v409 = vpop.f32.mrb[0].mxu0
        %v410 = vadd.f32 %v276, %v409
        %v411 = vpop.f32.mrb[0].mxu0
        %412 = vmatprep.mubr.f32.mxu0 %v236
        %413 = vmatmul.mubr.f32.gmra.mrb[0].mxu0 %v235
        %v414 = vpop.f32.mrb[0].mxu0
        %v415 = vadd.f32 %v276, %v414
        %v416 = vpop.f32.mrb[0].mxu0
        %417 = vmatprep.mubr.f32.mxu0 %v238
        %418 = vmatmul.mubr.f32.gmra.mrb[0].mxu0 %v237
        %v419 = vpop.f32.mrb[0].mxu0
        %v420 = vadd.f32 %v276, %v419
        %v421 = vpop.f32.mrb[0].mxu0
        %422 = vdwg.mxu0
        %v423 = vmul.f32 %v345, 30.0
        %v424 = vmul.f32 %v350, 30.0
        %v425 = vmul.f32 %v355, 30.0
        %v426 = vmul.f32 %v360, 30.0
        %v427 = vmul.f32 %v365, 30.0
        %v428 = vmul.f32 %v370, 30.0
        %v429 = vmul.f32 %v375, 30.0
        %v430 = vmul.f32 %v380, 30.0
        %v431 = vmul.f32 %v385, 30.0
        %v432 = vmul.f32 %v390, 30.0
        %v433 = vmul.f32 %v395, 30.0
        %v434 = vmul.f32 %v400, 30.0
        %v435 = vmul.f32 %v405, 30.0
        %v436 = vmul.f32 %v410, 30.0
        %v437 = vmul.f32 %v415, 30.0
        %v438 = vmul.f32 %v420, 30.0
        %v439 = vand.u32 2147483647, %v423
        %vm440 = vcmp.le.f32.partialorder %v439, 0.7853982
        %vm441 = vcmp.lt.s32.totalorder %v423, 0
        %v442 = vand.u32 %v423, 2139095040
        %v443 = vshrl.u32 %v442, 23
        %v444 = vsub.s32 %v443, 127
        %v445 = vand.u32 2147483647, %v423
        %v446 = vand.u32 %v445, 8388607
        %v447 = vor.u32 %v446, 8388608
        %v448 = vsub.s32 0, %v447
        %v449 = vadd.s32 %v444, 1
        %vm450 = vcmp.gt.s32.totalorder %v449, 0
        %v451 = vsel %vm450, %v449, 0
        %v452 = vshrl.u32 %v451, 5
        %v453 = vand.u32 %v451, 31
        %v454 = vsub.s32 32, %v453
        %v455 = vshrl.u32 683565275, %v454
        %v456 = vshll.u32 683565275, %v453
        %v457 = vshrl.u32 2475754826, %v454
        %v458 = vor.u32 %v456, %v457
        %v459 = vshll.u32 2475754826, %v453
        %v460 = vshrl.u32 2131351028, %v454
        %v461 = vor.u32 %v459, %v460
        %v462 = vshll.u32 2131351028, %v453
        %v463 = vshrl.u32 2102212464, %v454
        %v464 = vor.u32 %v462, %v463
        %v465 = vshll.u32 2102212464, %v453
        %v466 = vshrl.u32 920167782, %v454
        %v467 = vor.u32 %v465, %v466
        %v468 = vshll.u32 920167782, %v453
        %v469 = vshrl.u32 1326507024, %v454
        %v470 = vor.u32 %v468, %v469
        %vm471 = vcmp.lt.s32.totalorder %v452, 1
        %vm472 = vcmp.lt.s32.totalorder %v452, 2
        %vm473 = vcmp.lt.s32.totalorder %v452, 3
        %vm474 = vcmp.lt.s32.totalorder %v452, 4
        %v475 = vsel %vm471, %v455, %v458
        %v476 = vsel %vm474, %v464, 2102212464
        %v477 = vsel %vm473, %v461, %v476
        %v478 = vsel %vm472, %v475, %v477
        %v479 = vsel %vm471, %v458, %v461
        %v480 = vsel %vm474, %v467, 920167782
        %v481 = vsel %vm473, %v464, %v480
        %v482 = vsel %vm472, %v479, %v481
        %v483 = vsel %vm471, %v461, %v464
        %v484 = vsel %vm474, %v470, 1326507024
        %v485 = vsel %vm473, %v467, %v484
        %v486 = vsel %vm472, %v483, %v485
        %v487 = vshll.u32 %v447, 8
        %v488 = vmul.u32.u64.compose %v487, %v486
        %v489 = vextract.low.u32 %v488
        %v490 = vextract.high.u32 %v488
        %v491 = vmul.u32.u64.compose %v487, %v482
        %v492 = vextract.low.u32 %v491
        %v493 = vextract.high.u32 %v491
        %v494 = vmul.u32 %v487, %v478
        %v495 = vadd.s32 %v490, %v492
        %vm496 = vc.u32 %v490, %v492
        %v497 = vadd.s32 %v493, 1
        %v498 = vsel %vm496, %v497, %v493
        %v499 = vadd.s32 %v494, %v498
        %v500 = vadd.s32 %v499, 536870912
        %v501 = vshrl.u32 %v500, 30
        %v502 = vshll.u32 %v501, 30
        %v503 = vsub.s32 %v499, %v502
        %vm504 = vcmp.lt.s32.totalorder %v503, 0
        %v505 = vsub.s32 0, %v503
        %v506 = vsel %vm504, %v505, %v503
        %v507 = vclz %v506
        %v508 = vsub.s32 %v507, 2
        %vm509 = vcmp.gt.s32.totalorder 0, %v508
        %v510 = vsel %vm509, 0, %v508
        %v511 = vsub.s32 32, %v510
        %v512 = vshll.u32 %v503, %v510
        %v513 = vshrl.u32 %v495, %v511
        %v514 = vor.u32 %v512, %v513
        %v515 = vsub.s32 4294967266, %v510
        %v516 = vadd.s32 %v515, 127
        %v517 = vshll.u32 %v516, 23
        %v518 = vor.u32 4788187, %v517
        %v519 = vand.u32 2147483647, %v518
        %v521 = vcvt.s32.f32 %v514
        %v522 = vmul.f32 %v521, %v519
        %v523 = vxor.u32 %v522, 2147483648
        %v524 = vsel %vm441, %v523, %v522
        %v525 = vsub.s32 4, %v501
        %v526 = vsel %vm441, %v525, %v501
        %v527 = vsel %vm440, %v423, %v524
        %v528 = vsel %vm440, 0, %v526
        %v529 = vcosq.f32.pop %v527
        %v530 = vsinq.f32.pop %v527
        %vm531 = vweird.f32 %v423
        %v532 = vand.u32 %v528, 3
        %vm533 = vcmp.lt.s32.totalorder %v532, 2
        %vm534 = vcmp.eq.s32.totalorder %v532, 0
        %v535 = vxor.u32 %v530, 2147483648
        %v536 = vsel %vm534, %v529, %v535
        %vm537 = vcmp.eq.s32.totalorder %v532, 2
        %v538 = vxor.u32 %v529, 2147483648
        %v539 = vsel %vm537, %v538, %v530
        %v540 = vsel %vm533, %v536, %v539
        %v541 = vsel %vm531, nan, %v540
        %v542 = vand.u32 2147483647, %v424
        %vm543 = vcmp.le.f32.partialorder %v542, 0.7853982
        %vm544 = vcmp.lt.s32.totalorder %v424, 0
        %v545 = vand.u32 %v424, 2139095040
        %v546 = vshrl.u32 %v545, 23
        %v547 = vsub.s32 %v546, 127
        %v548 = vand.u32 2147483647, %v424
        %v549 = vand.u32 %v548, 8388607
        %v550 = vor.u32 %v549, 8388608
        %v551 = vsub.s32 0, %v550
        %v552 = vadd.s32 %v547, 1
        %vm553 = vcmp.gt.s32.totalorder %v552, 0
        %v554 = vsel %vm553, %v552, 0
        %v555 = vshrl.u32 %v554, 5
        %v556 = vand.u32 %v554, 31
        %v557 = vsub.s32 32, %v556
        %v558 = vshrl.u32 683565275, %v557
        %v559 = vshll.u32 683565275, %v556
        %v560 = vshrl.u32 2475754826, %v557
        %v561 = vor.u32 %v559, %v560
        %v562 = vshll.u32 2475754826, %v556
        %v563 = vshrl.u32 2131351028, %v557
        %v564 = vor.u32 %v562, %v563
        %v565 = vshll.u32 2131351028, %v556
        %v566 = vshrl.u32 2102212464, %v557
        %v567 = vor.u32 %v565, %v566
        %v568 = vshll.u32 2102212464, %v556
        %v569 = vshrl.u32 920167782, %v557
        %v570 = vor.u32 %v568, %v569
        %v571 = vshll.u32 920167782, %v556
        %v572 = vshrl.u32 1326507024, %v557
        %v573 = vor.u32 %v571, %v572
        %vm574 = vcmp.lt.s32.totalorder %v555, 1
        %vm575 = vcmp.lt.s32.totalorder %v555, 2
        %vm576 = vcmp.lt.s32.totalorder %v555, 3
        %vm577 = vcmp.lt.s32.totalorder %v555, 4
        %v578 = vsel %vm574, %v558, %v561
        %v579 = vsel %vm577, %v567, 2102212464
        %v580 = vsel %vm576, %v564, %v579
        %v581 = vsel %vm575, %v578, %v580
        %v582 = vsel %vm574, %v561, %v564
        %v583 = vsel %vm577, %v570, 920167782
        %v584 = vsel %vm576, %v567, %v583
        %v585 = vsel %vm575, %v582, %v584
        %v586 = vsel %vm574, %v564, %v567
        %v587 = vsel %vm577, %v573, 1326507024
        %v588 = vsel %vm576, %v570, %v587
        %v589 = vsel %vm575, %v586, %v588
        %v590 = vshll.u32 %v550, 8
        %v591 = vmul.u32.u64.compose %v590, %v589
        %v592 = vextract.low.u32 %v591
        %v593 = vextract.high.u32 %v591
        %v594 = vmul.u32.u64.compose %v590, %v585
        %v595 = vextract.low.u32 %v594
        %v596 = vextract.high.u32 %v594
        %v597 = vmul.u32 %v590, %v581
        %v598 = vadd.s32 %v593, %v595
        %vm599 = vc.u32 %v593, %v595
        %v600 = vadd.s32 %v596, 1
        %v601 = vsel %vm599, %v600, %v596
        %v602 = vadd.s32 %v597, %v601
        %v603 = vadd.s32 %v602, 536870912
        %v604 = vshrl.u32 %v603, 30
        %v605 = vshll.u32 %v604, 30
        %v606 = vsub.s32 %v602, %v605
        %vm607 = vcmp.lt.s32.totalorder %v606, 0
        %v608 = vsub.s32 0, %v606
        %v609 = vsel %vm607, %v608, %v606
        %v610 = vclz %v609
        %v611 = vsub.s32 %v610, 2
        %vm612 = vcmp.gt.s32.totalorder 0, %v611
        %v613 = vsel %vm612, 0, %v611
        %v614 = vsub.s32 32, %v613
        %v615 = vshll.u32 %v606, %v613
        %v616 = vshrl.u32 %v598, %v614
        %v617 = vor.u32 %v615, %v616
        %v618 = vsub.s32 4294967266, %v613
        %v619 = vadd.s32 %v618, 127
        %v620 = vshll.u32 %v619, 23
        %v621 = vor.u32 4788187, %v620
        %v622 = vand.u32 2147483647, %v621
        %v624 = vcvt.s32.f32 %v617
        %v625 = vmul.f32 %v624, %v622
        %v626 = vxor.u32 %v625, 2147483648
        %v627 = vsel %vm544, %v626, %v625
        %v628 = vsub.s32 4, %v604
        %v629 = vsel %vm544, %v628, %v604
        %v630 = vsel %vm543, %v424, %v627
        %v631 = vsel %vm543, 0, %v629
        %v632 = vcosq.f32.pop %v630
        %v633 = vsinq.f32.pop %v630
        %vm634 = vweird.f32 %v424
        %v635 = vand.u32 %v631, 3
        %vm636 = vcmp.lt.s32.totalorder %v635, 2
        %vm637 = vcmp.eq.s32.totalorder %v635, 0
        %v638 = vxor.u32 %v633, 2147483648
        %v639 = vsel %vm637, %v632, %v638
        %vm640 = vcmp.eq.s32.totalorder %v635, 2
        %v641 = vxor.u32 %v632, 2147483648
        %v642 = vsel %vm640, %v641, %v633
        %v643 = vsel %vm636, %v639, %v642
        %v644 = vsel %vm634, nan, %v643
        %v645 = vand.u32 2147483647, %v425
        %vm646 = vcmp.le.f32.partialorder %v645, 0.7853982
        %vm647 = vcmp.lt.s32.totalorder %v425, 0
        %v648 = vand.u32 %v425, 2139095040
        %v649 = vshrl.u32 %v648, 23
        %v650 = vsub.s32 %v649, 127
        %v651 = vand.u32 2147483647, %v425
        %v652 = vand.u32 %v651, 8388607
        %v653 = vor.u32 %v652, 8388608
        %v654 = vsub.s32 0, %v653
        %v655 = vadd.s32 %v650, 1
        %vm656 = vcmp.gt.s32.totalorder %v655, 0
        %v657 = vsel %vm656, %v655, 0
        %v658 = vshrl.u32 %v657, 5
        %v659 = vand.u32 %v657, 31
        %v660 = vsub.s32 32, %v659
        %v661 = vshrl.u32 683565275, %v660
        %v662 = vshll.u32 683565275, %v659
        %v663 = vshrl.u32 2475754826, %v660
        %v664 = vor.u32 %v662, %v663
        %v665 = vshll.u32 2475754826, %v659
        %v666 = vshrl.u32 2131351028, %v660
        %v667 = vor.u32 %v665, %v666
        %v668 = vshll.u32 2131351028, %v659
        %v669 = vshrl.u32 2102212464, %v660
        %v670 = vor.u32 %v668, %v669
        %v671 = vshll.u32 2102212464, %v659
        %v672 = vshrl.u32 920167782, %v660
        %v673 = vor.u32 %v671, %v672
        %v674 = vshll.u32 920167782, %v659
        %v675 = vshrl.u32 1326507024, %v660
        %v676 = vor.u32 %v674, %v675
        %vm677 = vcmp.lt.s32.totalorder %v658, 1
        %vm678 = vcmp.lt.s32.totalorder %v658, 2
        %vm679 = vcmp.lt.s32.totalorder %v658, 3
        %vm680 = vcmp.lt.s32.totalorder %v658, 4
        %v681 = vsel %vm677, %v661, %v664
        %v682 = vsel %vm680, %v670, 2102212464
        %v683 = vsel %vm679, %v667, %v682
        %v684 = vsel %vm678, %v681, %v683
        %v685 = vsel %vm677, %v664, %v667
        %v686 = vsel %vm680, %v673, 920167782
        %v687 = vsel %vm679, %v670, %v686
        %v688 = vsel %vm678, %v685, %v687
        %v689 = vsel %vm677, %v667, %v670
        %v690 = vsel %vm680, %v676, 1326507024
        %v691 = vsel %vm679, %v673, %v690
        %v692 = vsel %vm678, %v689, %v691
        %v693 = vshll.u32 %v653, 8
        %v694 = vmul.u32.u64.compose %v693, %v692
        %v695 = vextract.low.u32 %v694
        %v696 = vextract.high.u32 %v694
        %v697 = vmul.u32.u64.compose %v693, %v688
        %v698 = vextract.low.u32 %v697
        %v699 = vextract.high.u32 %v697
        %v700 = vmul.u32 %v693, %v684
        %v701 = vadd.s32 %v696, %v698
        %vm702 = vc.u32 %v696, %v698
        %v703 = vadd.s32 %v699, 1
        %v704 = vsel %vm702, %v703, %v699
        %v705 = vadd.s32 %v700, %v704
        %v706 = vadd.s32 %v705, 536870912
        %v707 = vshrl.u32 %v706, 30
        %v708 = vshll.u32 %v707, 30
        %v709 = vsub.s32 %v705, %v708
        %vm710 = vcmp.lt.s32.totalorder %v709, 0
        %v711 = vsub.s32 0, %v709
        %v712 = vsel %vm710, %v711, %v709
        %v713 = vclz %v712
        %v714 = vsub.s32 %v713, 2
        %vm715 = vcmp.gt.s32.totalorder 0, %v714
        %v716 = vsel %vm715, 0, %v714
        %v717 = vsub.s32 32, %v716
        %v718 = vshll.u32 %v709, %v716
        %v719 = vshrl.u32 %v701, %v717
        %v720 = vor.u32 %v718, %v719
        %v721 = vsub.s32 4294967266, %v716
        %v722 = vadd.s32 %v721, 127
        %v723 = vshll.u32 %v722, 23
        %v724 = vor.u32 4788187, %v723
        %v725 = vand.u32 2147483647, %v724
        %v727 = vcvt.s32.f32 %v720
        %v728 = vmul.f32 %v727, %v725
        %v729 = vxor.u32 %v728, 2147483648
        %v730 = vsel %vm647, %v729, %v728
        %v731 = vsub.s32 4, %v707
        %v732 = vsel %vm647, %v731, %v707
        %v733 = vsel %vm646, %v425, %v730
        %v734 = vsel %vm646, 0, %v732
        %v735 = vcosq.f32.pop %v733
        %v736 = vsinq.f32.pop %v733
        %vm737 = vweird.f32 %v425
        %v738 = vand.u32 %v734, 3
        %vm739 = vcmp.lt.s32.totalorder %v738, 2
        %vm740 = vcmp.eq.s32.totalorder %v738, 0
        %v741 = vxor.u32 %v736, 2147483648
        %v742 = vsel %vm740, %v735, %v741
        %vm743 = vcmp.eq.s32.totalorder %v738, 2
        %v744 = vxor.u32 %v735, 2147483648
        %v745 = vsel %vm743, %v744, %v736
        %v746 = vsel %vm739, %v742, %v745
        %v747 = vsel %vm737, nan, %v746
        %v748 = vand.u32 2147483647, %v426
        %vm749 = vcmp.le.f32.partialorder %v748, 0.7853982
        %vm750 = vcmp.lt.s32.totalorder %v426, 0
        %v751 = vand.u32 %v426, 2139095040
        %v752 = vshrl.u32 %v751, 23
        %v753 = vsub.s32 %v752, 127
        %v754 = vand.u32 2147483647, %v426
        %v755 = vand.u32 %v754, 8388607
        %v756 = vor.u32 %v755, 8388608
        %v757 = vsub.s32 0, %v756
        %v758 = vadd.s32 %v753, 1
        %vm759 = vcmp.gt.s32.totalorder %v758, 0
        %v760 = vsel %vm759, %v758, 0
        %v761 = vshrl.u32 %v760, 5
        %v762 = vand.u32 %v760, 31
        %v763 = vsub.s32 32, %v762
        %v764 = vshrl.u32 683565275, %v763
        %v765 = vshll.u32 683565275, %v762
        %v766 = vshrl.u32 2475754826, %v763
        %v767 = vor.u32 %v765, %v766
        %v768 = vshll.u32 2475754826, %v762
        %v769 = vshrl.u32 2131351028, %v763
        %v770 = vor.u32 %v768, %v769
        %v771 = vshll.u32 2131351028, %v762
        %v772 = vshrl.u32 2102212464, %v763
        %v773 = vor.u32 %v771, %v772
        %v774 = vshll.u32 2102212464, %v762
        %v775 = vshrl.u32 920167782, %v763
        %v776 = vor.u32 %v774, %v775
        %v777 = vshll.u32 920167782, %v762
        %v778 = vshrl.u32 1326507024, %v763
        %v779 = vor.u32 %v777, %v778
        %vm780 = vcmp.lt.s32.totalorder %v761, 1
        %vm781 = vcmp.lt.s32.totalorder %v761, 2
        %vm782 = vcmp.lt.s32.totalorder %v761, 3
        %vm783 = vcmp.lt.s32.totalorder %v761, 4
        %v784 = vsel %vm780, %v764, %v767
        %v785 = vsel %vm783, %v773, 2102212464
        %v786 = vsel %vm782, %v770, %v785
        %v787 = vsel %vm781, %v784, %v786
        %v788 = vsel %vm780, %v767, %v770
        %v789 = vsel %vm783, %v776, 920167782
        %v790 = vsel %vm782, %v773, %v789
        %v791 = vsel %vm781, %v788, %v790
        %v792 = vsel %vm780, %v770, %v773
        %v793 = vsel %vm783, %v779, 1326507024
        %v794 = vsel %vm782, %v776, %v793
        %v795 = vsel %vm781, %v792, %v794
        %v796 = vshll.u32 %v756, 8
        %v797 = vmul.u32.u64.compose %v796, %v795
        %v798 = vextract.low.u32 %v797
        %v799 = vextract.high.u32 %v797
        %v800 = vmul.u32.u64.compose %v796, %v791
        %v801 = vextract.low.u32 %v800
        %v802 = vextract.high.u32 %v800
        %v803 = vmul.u32 %v796, %v787
        %v804 = vadd.s32 %v799, %v801
        %vm805 = vc.u32 %v799, %v801
        %v806 = vadd.s32 %v802, 1
        %v807 = vsel %vm805, %v806, %v802
        %v808 = vadd.s32 %v803, %v807
        %v809 = vadd.s32 %v808, 536870912
        %v810 = vshrl.u32 %v809, 30
        %v811 = vshll.u32 %v810, 30
        %v812 = vsub.s32 %v808, %v811
        %vm813 = vcmp.lt.s32.totalorder %v812, 0
        %v814 = vsub.s32 0, %v812
        %v815 = vsel %vm813, %v814, %v812
        %v816 = vclz %v815
        %v817 = vsub.s32 %v816, 2
        %vm818 = vcmp.gt.s32.totalorder 0, %v817
        %v819 = vsel %vm818, 0, %v817
        %v820 = vsub.s32 32, %v819
        %v821 = vshll.u32 %v812, %v819
        %v822 = vshrl.u32 %v804, %v820
        %v823 = vor.u32 %v821, %v822
        %v824 = vsub.s32 4294967266, %v819
        %v825 = vadd.s32 %v824, 127
        %v826 = vshll.u32 %v825, 23
        %v827 = vor.u32 4788187, %v826
        %v828 = vand.u32 2147483647, %v827
        %v830 = vcvt.s32.f32 %v823
        %v831 = vmul.f32 %v830, %v828
        %v832 = vxor.u32 %v831, 2147483648
        %v833 = vsel %vm750, %v832, %v831
        %v834 = vsub.s32 4, %v810
        %v835 = vsel %vm750, %v834, %v810
        %v836 = vsel %vm749, %v426, %v833
        %v837 = vsel %vm749, 0, %v835
        %v838 = vcosq.f32.pop %v836
        %v839 = vsinq.f32.pop %v836
        %vm840 = vweird.f32 %v426
        %v841 = vand.u32 %v837, 3
        %vm842 = vcmp.lt.s32.totalorder %v841, 2
        %vm843 = vcmp.eq.s32.totalorder %v841, 0
        %v844 = vxor.u32 %v839, 2147483648
        %v845 = vsel %vm843, %v838, %v844
        %vm846 = vcmp.eq.s32.totalorder %v841, 2
        %v847 = vxor.u32 %v838, 2147483648
        %v848 = vsel %vm846, %v847, %v839
        %v849 = vsel %vm842, %v845, %v848
        %v850 = vsel %vm840, nan, %v849
        %v851 = vand.u32 2147483647, %v427
        %vm852 = vcmp.le.f32.partialorder %v851, 0.7853982
        %vm853 = vcmp.lt.s32.totalorder %v427, 0
        %v854 = vand.u32 %v427, 2139095040
        %v855 = vshrl.u32 %v854, 23
        %v856 = vsub.s32 %v855, 127
        %v857 = vand.u32 2147483647, %v427
        %v858 = vand.u32 %v857, 8388607
        %v859 = vor.u32 %v858, 8388608
        %v860 = vsub.s32 0, %v859
        %v861 = vadd.s32 %v856, 1
        %vm862 = vcmp.gt.s32.totalorder %v861, 0
        %v863 = vsel %vm862, %v861, 0
        %v864 = vshrl.u32 %v863, 5
        %v865 = vand.u32 %v863, 31
        %v866 = vsub.s32 32, %v865
        %v867 = vshrl.u32 683565275, %v866
        %v868 = vshll.u32 683565275, %v865
        %v869 = vshrl.u32 2475754826, %v866
        %v870 = vor.u32 %v868, %v869
        %v871 = vshll.u32 2475754826, %v865
        %v872 = vshrl.u32 2131351028, %v866
        %v873 = vor.u32 %v871, %v872
        %v874 = vshll.u32 2131351028, %v865
        %v875 = vshrl.u32 2102212464, %v866
        %v876 = vor.u32 %v874, %v875
        %v877 = vshll.u32 2102212464, %v865
        %v878 = vshrl.u32 920167782, %v866
        %v879 = vor.u32 %v877, %v878
        %v880 = vshll.u32 920167782, %v865
        %v881 = vshrl.u32 1326507024, %v866
        %v882 = vor.u32 %v880, %v881
        %vm883 = vcmp.lt.s32.totalorder %v864, 1
        %vm884 = vcmp.lt.s32.totalorder %v864, 2
        %vm885 = vcmp.lt.s32.totalorder %v864, 3
        %vm886 = vcmp.lt.s32.totalorder %v864, 4
        %v887 = vsel %vm883, %v867, %v870
        %v888 = vsel %vm886, %v876, 2102212464
        %v889 = vsel %vm885, %v873, %v888
        %v890 = vsel %vm884, %v887, %v889
        %v891 = vsel %vm883, %v870, %v873
        %v892 = vsel %vm886, %v879, 920167782
        %v893 = vsel %vm885, %v876, %v892
        %v894 = vsel %vm884, %v891, %v893
        %v895 = vsel %vm883, %v873, %v876
        %v896 = vsel %vm886, %v882, 1326507024
        %v897 = vsel %vm885, %v879, %v896
        %v898 = vsel %vm884, %v895, %v897
        %v899 = vshll.u32 %v859, 8
        %v900 = vmul.u32.u64.compose %v899, %v898
        %v901 = vextract.low.u32 %v900
        %v902 = vextract.high.u32 %v900
        %v903 = vmul.u32.u64.compose %v899, %v894
        %v904 = vextract.low.u32 %v903
        %v905 = vextract.high.u32 %v903
        %v906 = vmul.u32 %v899, %v890
        %v907 = vadd.s32 %v902, %v904
        %vm908 = vc.u32 %v902, %v904
        %v909 = vadd.s32 %v905, 1
        %v910 = vsel %vm908, %v909, %v905
        %v911 = vadd.s32 %v906, %v910
        %v912 = vadd.s32 %v911, 536870912
        %v913 = vshrl.u32 %v912, 30
        %v914 = vshll.u32 %v913, 30
        %v915 = vsub.s32 %v911, %v914
        %vm916 = vcmp.lt.s32.totalorder %v915, 0
        %v917 = vsub.s32 0, %v915
        %v918 = vsel %vm916, %v917, %v915
        %v919 = vclz %v918
        %v920 = vsub.s32 %v919, 2
        %vm921 = vcmp.gt.s32.totalorder 0, %v920
        %v922 = vsel %vm921, 0, %v920
        %v923 = vsub.s32 32, %v922
        %v924 = vshll.u32 %v915, %v922
        %v925 = vshrl.u32 %v907, %v923
        %v926 = vor.u32 %v924, %v925
        %v927 = vsub.s32 4294967266, %v922
        %v928 = vadd.s32 %v927, 127
        %v929 = vshll.u32 %v928, 23
        %v930 = vor.u32 4788187, %v929
        %v931 = vand.u32 2147483647, %v930
        %v933 = vcvt.s32.f32 %v926
        %v934 = vmul.f32 %v933, %v931
        %v935 = vxor.u32 %v934, 2147483648
        %v936 = vsel %vm853, %v935, %v934
        %v937 = vsub.s32 4, %v913
        %v938 = vsel %vm853, %v937, %v913
        %v939 = vsel %vm852, %v427, %v936
        %v940 = vsel %vm852, 0, %v938
        %v941 = vcosq.f32.pop %v939
        %v942 = vsinq.f32.pop %v939
        %vm943 = vweird.f32 %v427
        %v944 = vand.u32 %v940, 3
        %vm945 = vcmp.lt.s32.totalorder %v944, 2
        %vm946 = vcmp.eq.s32.totalorder %v944, 0
        %v947 = vxor.u32 %v942, 2147483648
        %v948 = vsel %vm946, %v941, %v947
        %vm949 = vcmp.eq.s32.totalorder %v944, 2
        %v950 = vxor.u32 %v941, 2147483648
        %v951 = vsel %vm949, %v950, %v942
        %v952 = vsel %vm945, %v948, %v951
        %v953 = vsel %vm943, nan, %v952
        %v954 = vand.u32 2147483647, %v428
        %vm955 = vcmp.le.f32.partialorder %v954, 0.7853982
        %vm956 = vcmp.lt.s32.totalorder %v428, 0
        %v957 = vand.u32 %v428, 2139095040
        %v958 = vshrl.u32 %v957, 23
        %v959 = vsub.s32 %v958, 127
        %v960 = vand.u32 2147483647, %v428
        %v961 = vand.u32 %v960, 8388607
        %v962 = vor.u32 %v961, 8388608
        %v963 = vsub.s32 0, %v962
        %v964 = vadd.s32 %v959, 1
        %vm965 = vcmp.gt.s32.totalorder %v964, 0
        %v966 = vsel %vm965, %v964, 0
        %v967 = vshrl.u32 %v966, 5
        %v968 = vand.u32 %v966, 31
        %v969 = vsub.s32 32, %v968
        %v970 = vshrl.u32 683565275, %v969
        %v971 = vshll.u32 683565275, %v968
        %v972 = vshrl.u32 2475754826, %v969
        %v973 = vor.u32 %v971, %v972
        %v974 = vshll.u32 2475754826, %v968
        %v975 = vshrl.u32 2131351028, %v969
        %v976 = vor.u32 %v974, %v975
        %v977 = vshll.u32 2131351028, %v968
        %v978 = vshrl.u32 2102212464, %v969
        %v979 = vor.u32 %v977, %v978
        %v980 = vshll.u32 2102212464, %v968
        %v981 = vshrl.u32 920167782, %v969
        %v982 = vor.u32 %v980, %v981
        %v983 = vshll.u32 920167782, %v968
        %v984 = vshrl.u32 1326507024, %v969
        %v985 = vor.u32 %v983, %v984
        %vm986 = vcmp.lt.s32.totalorder %v967, 1
        %vm987 = vcmp.lt.s32.totalorder %v967, 2
        %vm988 = vcmp.lt.s32.totalorder %v967, 3
        %vm989 = vcmp.lt.s32.totalorder %v967, 4
        %v990 = vsel %vm986, %v970, %v973
        %v991 = vsel %vm989, %v979, 2102212464
        %v992 = vsel %vm988, %v976, %v991
        %v993 = vsel %vm987, %v990, %v992
        %v994 = vsel %vm986, %v973, %v976
        %v995 = vsel %vm989, %v982, 920167782
        %v996 = vsel %vm988, %v979, %v995
        %v997 = vsel %vm987, %v994, %v996
        %v998 = vsel %vm986, %v976, %v979
        %v999 = vsel %vm989, %v985, 1326507024
        %v1000 = vsel %vm988, %v982, %v999
        %v1001 = vsel %vm987, %v998, %v1000
        %v1002 = vshll.u32 %v962, 8
        %v1003 = vmul.u32.u64.compose %v1002, %v1001
        %v1004 = vextract.low.u32 %v1003
        %v1005 = vextract.high.u32 %v1003
        %v1006 = vmul.u32.u64.compose %v1002, %v997
        %v1007 = vextract.low.u32 %v1006
        %v1008 = vextract.high.u32 %v1006
        %v1009 = vmul.u32 %v1002, %v993
        %v1010 = vadd.s32 %v1005, %v1007
        %vm1011 = vc.u32 %v1005, %v1007
        %v1012 = vadd.s32 %v1008, 1
        %v1013 = vsel %vm1011, %v1012, %v1008
        %v1014 = vadd.s32 %v1009, %v1013
        %v1015 = vadd.s32 %v1014, 536870912
        %v1016 = vshrl.u32 %v1015, 30
        %v1017 = vshll.u32 %v1016, 30
        %v1018 = vsub.s32 %v1014, %v1017
        %vm1019 = vcmp.lt.s32.totalorder %v1018, 0
        %v1020 = vsub.s32 0, %v1018
        %v1021 = vsel %vm1019, %v1020, %v1018
        %v1022 = vclz %v1021
        %v1023 = vsub.s32 %v1022, 2
        %vm1024 = vcmp.gt.s32.totalorder 0, %v1023
        %v1025 = vsel %vm1024, 0, %v1023
        %v1026 = vsub.s32 32, %v1025
        %v1027 = vshll.u32 %v1018, %v1025
        %v1028 = vshrl.u32 %v1010, %v1026
        %v1029 = vor.u32 %v1027, %v1028
        %v1030 = vsub.s32 4294967266, %v1025
        %v1031 = vadd.s32 %v1030, 127
        %v1032 = vshll.u32 %v1031, 23
        %v1033 = vor.u32 4788187, %v1032
        %v1034 = vand.u32 2147483647, %v1033
        %v1036 = vcvt.s32.f32 %v1029
        %v1037 = vmul.f32 %v1036, %v1034
        %v1038 = vxor.u32 %v1037, 2147483648
        %v1039 = vsel %vm956, %v1038, %v1037
        %v1040 = vsub.s32 4, %v1016
        %v1041 = vsel %vm956, %v1040, %v1016
        %v1042 = vsel %vm955, %v428, %v1039
        %v1043 = vsel %vm955, 0, %v1041
        %v1044 = vcosq.f32.pop %v1042
        %v1045 = vsinq.f32.pop %v1042
        %vm1046 = vweird.f32 %v428
        %v1047 = vand.u32 %v1043, 3
        %vm1048 = vcmp.lt.s32.totalorder %v1047, 2
        %vm1049 = vcmp.eq.s32.totalorder %v1047, 0
        %v1050 = vxor.u32 %v1045, 2147483648
        %v1051 = vsel %vm1049, %v1044, %v1050
        %vm1052 = vcmp.eq.s32.totalorder %v1047, 2
        %v1053 = vxor.u32 %v1044, 2147483648
        %v1054 = vsel %vm1052, %v1053, %v1045
        %v1055 = vsel %vm1048, %v1051, %v1054
        %v1056 = vsel %vm1046, nan, %v1055
        %v1057 = vand.u32 2147483647, %v429
        %vm1058 = vcmp.le.f32.partialorder %v1057, 0.7853982
        %vm1059 = vcmp.lt.s32.totalorder %v429, 0
        %v1060 = vand.u32 %v429, 2139095040
        %v1061 = vshrl.u32 %v1060, 23
        %v1062 = vsub.s32 %v1061, 127
        %v1063 = vand.u32 2147483647, %v429
        %v1064 = vand.u32 %v1063, 8388607
        %v1065 = vor.u32 %v1064, 8388608
        %v1066 = vsub.s32 0, %v1065
        %v1067 = vadd.s32 %v1062, 1
        %vm1068 = vcmp.gt.s32.totalorder %v1067, 0
        %v1069 = vsel %vm1068, %v1067, 0
        %v1070 = vshrl.u32 %v1069, 5
        %v1071 = vand.u32 %v1069, 31
        %v1072 = vsub.s32 32, %v1071
        %v1073 = vshrl.u32 683565275, %v1072
        %v1074 = vshll.u32 683565275, %v1071
        %v1075 = vshrl.u32 2475754826, %v1072
        %v1076 = vor.u32 %v1074, %v1075
        %v1077 = vshll.u32 2475754826, %v1071
        %v1078 = vshrl.u32 2131351028, %v1072
        %v1079 = vor.u32 %v1077, %v1078
        %v1080 = vshll.u32 2131351028, %v1071
        %v1081 = vshrl.u32 2102212464, %v1072
        %v1082 = vor.u32 %v1080, %v1081
        %v1083 = vshll.u32 2102212464, %v1071
        %v1084 = vshrl.u32 920167782, %v1072
        %v1085 = vor.u32 %v1083, %v1084
        %v1086 = vshll.u32 920167782, %v1071
        %v1087 = vshrl.u32 1326507024, %v1072
        %v1088 = vor.u32 %v1086, %v1087
        %vm1089 = vcmp.lt.s32.totalorder %v1070, 1
        %vm1090 = vcmp.lt.s32.totalorder %v1070, 2
        %vm1091 = vcmp.lt.s32.totalorder %v1070, 3
        %vm1092 = vcmp.lt.s32.totalorder %v1070, 4
        %v1093 = vsel %vm1089, %v1073, %v1076
        %v1094 = vsel %vm1092, %v1082, 2102212464
        %v1095 = vsel %vm1091, %v1079, %v1094
        %v1096 = vsel %vm1090, %v1093, %v1095
        %v1097 = vsel %vm1089, %v1076, %v1079
        %v1098 = vsel %vm1092, %v1085, 920167782
        %v1099 = vsel %vm1091, %v1082, %v1098
        %v1100 = vsel %vm1090, %v1097, %v1099
        %v1101 = vsel %vm1089, %v1079, %v1082
        %v1102 = vsel %vm1092, %v1088, 1326507024
        %v1103 = vsel %vm1091, %v1085, %v1102
        %v1104 = vsel %vm1090, %v1101, %v1103
        %v1105 = vshll.u32 %v1065, 8
        %v1106 = vmul.u32.u64.compose %v1105, %v1104
        %v1107 = vextract.low.u32 %v1106
        %v1108 = vextract.high.u32 %v1106
        %v1109 = vmul.u32.u64.compose %v1105, %v1100
        %v1110 = vextract.low.u32 %v1109
        %v1111 = vextract.high.u32 %v1109
        %v1112 = vmul.u32 %v1105, %v1096
        %v1113 = vadd.s32 %v1108, %v1110
        %vm1114 = vc.u32 %v1108, %v1110
        %v1115 = vadd.s32 %v1111, 1
        %v1116 = vsel %vm1114, %v1115, %v1111
        %v1117 = vadd.s32 %v1112, %v1116
        %v1118 = vadd.s32 %v1117, 536870912
        %v1119 = vshrl.u32 %v1118, 30
        %v1120 = vshll.u32 %v1119, 30
        %v1121 = vsub.s32 %v1117, %v1120
        %vm1122 = vcmp.lt.s32.totalorder %v1121, 0
        %v1123 = vsub.s32 0, %v1121
        %v1124 = vsel %vm1122, %v1123, %v1121
        %v1125 = vclz %v1124
        %v1126 = vsub.s32 %v1125, 2
        %vm1127 = vcmp.gt.s32.totalorder 0, %v1126
        %v1128 = vsel %vm1127, 0, %v1126
        %v1129 = vsub.s32 32, %v1128
        %v1130 = vshll.u32 %v1121, %v1128
        %v1131 = vshrl.u32 %v1113, %v1129
        %v1132 = vor.u32 %v1130, %v1131
        %v1133 = vsub.s32 4294967266, %v1128
        %v1134 = vadd.s32 %v1133, 127
        %v1135 = vshll.u32 %v1134, 23
        %v1136 = vor.u32 4788187, %v1135
        %v1137 = vand.u32 2147483647, %v1136
        %v1139 = vcvt.s32.f32 %v1132
        %v1140 = vmul.f32 %v1139, %v1137
        %v1141 = vxor.u32 %v1140, 2147483648
        %v1142 = vsel %vm1059, %v1141, %v1140
        %v1143 = vsub.s32 4, %v1119
        %v1144 = vsel %vm1059, %v1143, %v1119
        %v1145 = vsel %vm1058, %v429, %v1142
        %v1146 = vsel %vm1058, 0, %v1144
        %v1147 = vcosq.f32.pop %v1145
        %v1148 = vsinq.f32.pop %v1145
        %vm1149 = vweird.f32 %v429
        %v1150 = vand.u32 %v1146, 3
        %vm1151 = vcmp.lt.s32.totalorder %v1150, 2
        %vm1152 = vcmp.eq.s32.totalorder %v1150, 0
        %v1153 = vxor.u32 %v1148, 2147483648
        %v1154 = vsel %vm1152, %v1147, %v1153
        %vm1155 = vcmp.eq.s32.totalorder %v1150, 2
        %v1156 = vxor.u32 %v1147, 2147483648
        %v1157 = vsel %vm1155, %v1156, %v1148
        %v1158 = vsel %vm1151, %v1154, %v1157
        %v1159 = vsel %vm1149, nan, %v1158
        %v1160 = vand.u32 2147483647, %v430
        %vm1161 = vcmp.le.f32.partialorder %v1160, 0.7853982
        %vm1162 = vcmp.lt.s32.totalorder %v430, 0
        %v1163 = vand.u32 %v430, 2139095040
        %v1164 = vshrl.u32 %v1163, 23
        %v1165 = vsub.s32 %v1164, 127
        %v1166 = vand.u32 2147483647, %v430
        %v1167 = vand.u32 %v1166, 8388607
        %v1168 = vor.u32 %v1167, 8388608
        %v1169 = vsub.s32 0, %v1168
        %v1170 = vadd.s32 %v1165, 1
        %vm1171 = vcmp.gt.s32.totalorder %v1170, 0
        %v1172 = vsel %vm1171, %v1170, 0
        %v1173 = vshrl.u32 %v1172, 5
        %v1174 = vand.u32 %v1172, 31
        %v1175 = vsub.s32 32, %v1174
        %v1176 = vshrl.u32 683565275, %v1175
        %v1177 = vshll.u32 683565275, %v1174
        %v1178 = vshrl.u32 2475754826, %v1175
        %v1179 = vor.u32 %v1177, %v1178
        %v1180 = vshll.u32 2475754826, %v1174
        %v1181 = vshrl.u32 2131351028, %v1175
        %v1182 = vor.u32 %v1180, %v1181
        %v1183 = vshll.u32 2131351028, %v1174
        %v1184 = vshrl.u32 2102212464, %v1175
        %v1185 = vor.u32 %v1183, %v1184
        %v1186 = vshll.u32 2102212464, %v1174
        %v1187 = vshrl.u32 920167782, %v1175
        %v1188 = vor.u32 %v1186, %v1187
        %v1189 = vshll.u32 920167782, %v1174
        %v1190 = vshrl.u32 1326507024, %v1175
        %v1191 = vor.u32 %v1189, %v1190
        %vm1192 = vcmp.lt.s32.totalorder %v1173, 1
        %vm1193 = vcmp.lt.s32.totalorder %v1173, 2
        %vm1194 = vcmp.lt.s32.totalorder %v1173, 3
        %vm1195 = vcmp.lt.s32.totalorder %v1173, 4
        %v1196 = vsel %vm1192, %v1176, %v1179
        %v1197 = vsel %vm1195, %v1185, 2102212464
        %v1198 = vsel %vm1194, %v1182, %v1197
        %v1199 = vsel %vm1193, %v1196, %v1198
        %v1200 = vsel %vm1192, %v1179, %v1182
        %v1201 = vsel %vm1195, %v1188, 920167782
        %v1202 = vsel %vm1194, %v1185, %v1201
        %v1203 = vsel %vm1193, %v1200, %v1202
        %v1204 = vsel %vm1192, %v1182, %v1185
        %v1205 = vsel %vm1195, %v1191, 1326507024
        %v1206 = vsel %vm1194, %v1188, %v1205
        %v1207 = vsel %vm1193, %v1204, %v1206
        %v1208 = vshll.u32 %v1168, 8
        %v1209 = vmul.u32.u64.compose %v1208, %v1207
        %v1210 = vextract.low.u32 %v1209
        %v1211 = vextract.high.u32 %v1209
        %v1212 = vmul.u32.u64.compose %v1208, %v1203
        %v1213 = vextract.low.u32 %v1212
        %v1214 = vextract.high.u32 %v1212
        %v1215 = vmul.u32 %v1208, %v1199
        %v1216 = vadd.s32 %v1211, %v1213
        %vm1217 = vc.u32 %v1211, %v1213
        %v1218 = vadd.s32 %v1214, 1
        %v1219 = vsel %vm1217, %v1218, %v1214
        %v1220 = vadd.s32 %v1215, %v1219
        %v1221 = vadd.s32 %v1220, 536870912
        %v1222 = vshrl.u32 %v1221, 30
        %v1223 = vshll.u32 %v1222, 30
        %v1224 = vsub.s32 %v1220, %v1223
        %vm1225 = vcmp.lt.s32.totalorder %v1224, 0
        %v1226 = vsub.s32 0, %v1224
        %v1227 = vsel %vm1225, %v1226, %v1224
        %v1228 = vclz %v1227
        %v1229 = vsub.s32 %v1228, 2
        %vm1230 = vcmp.gt.s32.totalorder 0, %v1229
        %v1231 = vsel %vm1230, 0, %v1229
        %v1232 = vsub.s32 32, %v1231
        %v1233 = vshll.u32 %v1224, %v1231
        %v1234 = vshrl.u32 %v1216, %v1232
        %v1235 = vor.u32 %v1233, %v1234
        %v1236 = vsub.s32 4294967266, %v1231
        %v1237 = vadd.s32 %v1236, 127
        %v1238 = vshll.u32 %v1237, 23
        %v1239 = vor.u32 4788187, %v1238
        %v1240 = vand.u32 2147483647, %v1239
        %v1242 = vcvt.s32.f32 %v1235
        %v1243 = vmul.f32 %v1242, %v1240
        %v1244 = vxor.u32 %v1243, 2147483648
        %v1245 = vsel %vm1162, %v1244, %v1243
        %v1246 = vsub.s32 4, %v1222
        %v1247 = vsel %vm1162, %v1246, %v1222
        %v1248 = vsel %vm1161, %v430, %v1245
        %v1249 = vsel %vm1161, 0, %v1247
        %v1250 = vcosq.f32.pop %v1248
        %v1251 = vsinq.f32.pop %v1248
        %vm1252 = vweird.f32 %v430
        %v1253 = vand.u32 %v1249, 3
        %vm1254 = vcmp.lt.s32.totalorder %v1253, 2
        %vm1255 = vcmp.eq.s32.totalorder %v1253, 0
        %v1256 = vxor.u32 %v1251, 2147483648
        %v1257 = vsel %vm1255, %v1250, %v1256
        %vm1258 = vcmp.eq.s32.totalorder %v1253, 2
        %v1259 = vxor.u32 %v1250, 2147483648
        %v1260 = vsel %vm1258, %v1259, %v1251
        %v1261 = vsel %vm1254, %v1257, %v1260
        %v1262 = vsel %vm1252, nan, %v1261
        %v1263 = vand.u32 2147483647, %v431
        %vm1264 = vcmp.le.f32.partialorder %v1263, 0.7853982
        %vm1265 = vcmp.lt.s32.totalorder %v431, 0
        %v1266 = vand.u32 %v431, 2139095040
        %v1267 = vshrl.u32 %v1266, 23
        %v1268 = vsub.s32 %v1267, 127
        %v1269 = vand.u32 2147483647, %v431
        %v1270 = vand.u32 %v1269, 8388607
        %v1271 = vor.u32 %v1270, 8388608
        %v1272 = vsub.s32 0, %v1271
        %v1273 = vadd.s32 %v1268, 1
        %vm1274 = vcmp.gt.s32.totalorder %v1273, 0
        %v1275 = vsel %vm1274, %v1273, 0
        %v1276 = vshrl.u32 %v1275, 5
        %v1277 = vand.u32 %v1275, 31
        %v1278 = vsub.s32 32, %v1277
        %v1279 = vshrl.u32 683565275, %v1278
        %v1280 = vshll.u32 683565275, %v1277
        %v1281 = vshrl.u32 2475754826, %v1278
        %v1282 = vor.u32 %v1280, %v1281
        %v1283 = vshll.u32 2475754826, %v1277
        %v1284 = vshrl.u32 2131351028, %v1278
        %v1285 = vor.u32 %v1283, %v1284
        %v1286 = vshll.u32 2131351028, %v1277
        %v1287 = vshrl.u32 2102212464, %v1278
        %v1288 = vor.u32 %v1286, %v1287
        %v1289 = vshll.u32 2102212464, %v1277
        %v1290 = vshrl.u32 920167782, %v1278
        %v1291 = vor.u32 %v1289, %v1290
        %v1292 = vshll.u32 920167782, %v1277
        %v1293 = vshrl.u32 1326507024, %v1278
        %v1294 = vor.u32 %v1292, %v1293
        %vm1295 = vcmp.lt.s32.totalorder %v1276, 1
        %vm1296 = vcmp.lt.s32.totalorder %v1276, 2
        %vm1297 = vcmp.lt.s32.totalorder %v1276, 3
        %vm1298 = vcmp.lt.s32.totalorder %v1276, 4
        %v1299 = vsel %vm1295, %v1279, %v1282
        %v1300 = vsel %vm1298, %v1288, 2102212464
        %v1301 = vsel %vm1297, %v1285, %v1300
        %v1302 = vsel %vm1296, %v1299, %v1301
        %v1303 = vsel %vm1295, %v1282, %v1285
        %v1304 = vsel %vm1298, %v1291, 920167782
        %v1305 = vsel %vm1297, %v1288, %v1304
        %v1306 = vsel %vm1296, %v1303, %v1305
        %v1307 = vsel %vm1295, %v1285, %v1288
        %v1308 = vsel %vm1298, %v1294, 1326507024
        %v1309 = vsel %vm1297, %v1291, %v1308
        %v1310 = vsel %vm1296, %v1307, %v1309
        %v1311 = vshll.u32 %v1271, 8
        %v1312 = vmul.u32.u64.compose %v1311, %v1310
        %v1313 = vextract.low.u32 %v1312
        %v1314 = vextract.high.u32 %v1312
        %v1315 = vmul.u32.u64.compose %v1311, %v1306
        %v1316 = vextract.low.u32 %v1315
        %v1317 = vextract.high.u32 %v1315
        %v1318 = vmul.u32 %v1311, %v1302
        %v1319 = vadd.s32 %v1314, %v1316
        %vm1320 = vc.u32 %v1314, %v1316
        %v1321 = vadd.s32 %v1317, 1
        %v1322 = vsel %vm1320, %v1321, %v1317
        %v1323 = vadd.s32 %v1318, %v1322
        %v1324 = vadd.s32 %v1323, 536870912
        %v1325 = vshrl.u32 %v1324, 30
        %v1326 = vshll.u32 %v1325, 30
        %v1327 = vsub.s32 %v1323, %v1326
        %vm1328 = vcmp.lt.s32.totalorder %v1327, 0
        %v1329 = vsub.s32 0, %v1327
        %v1330 = vsel %vm1328, %v1329, %v1327
        %v1331 = vclz %v1330
        %v1332 = vsub.s32 %v1331, 2
        %vm1333 = vcmp.gt.s32.totalorder 0, %v1332
        %v1334 = vsel %vm1333, 0, %v1332
        %v1335 = vsub.s32 32, %v1334
        %v1336 = vshll.u32 %v1327, %v1334
        %v1337 = vshrl.u32 %v1319, %v1335
        %v1338 = vor.u32 %v1336, %v1337
        %v1339 = vsub.s32 4294967266, %v1334
        %v1340 = vadd.s32 %v1339, 127
        %v1341 = vshll.u32 %v1340, 23
        %v1342 = vor.u32 4788187, %v1341
        %v1343 = vand.u32 2147483647, %v1342
        %v1345 = vcvt.s32.f32 %v1338
        %v1346 = vmul.f32 %v1345, %v1343
        %v1347 = vxor.u32 %v1346, 2147483648
        %v1348 = vsel %vm1265, %v1347, %v1346
        %v1349 = vsub.s32 4, %v1325
        %v1350 = vsel %vm1265, %v1349, %v1325
        %v1351 = vsel %vm1264, %v431, %v1348
        %v1352 = vsel %vm1264, 0, %v1350
        %v1353 = vcosq.f32.pop %v1351
        %v1354 = vsinq.f32.pop %v1351
        %vm1355 = vweird.f32 %v431
        %v1356 = vand.u32 %v1352, 3
        %vm1357 = vcmp.lt.s32.totalorder %v1356, 2
        %vm1358 = vcmp.eq.s32.totalorder %v1356, 0
        %v1359 = vxor.u32 %v1354, 2147483648
        %v1360 = vsel %vm1358, %v1353, %v1359
        %vm1361 = vcmp.eq.s32.totalorder %v1356, 2
        %v1362 = vxor.u32 %v1353, 2147483648
        %v1363 = vsel %vm1361, %v1362, %v1354
        %v1364 = vsel %vm1357, %v1360, %v1363
        %v1365 = vsel %vm1355, nan, %v1364
        %v1366 = vand.u32 2147483647, %v432
        %vm1367 = vcmp.le.f32.partialorder %v1366, 0.7853982
        %vm1368 = vcmp.lt.s32.totalorder %v432, 0
        %v1369 = vand.u32 %v432, 2139095040
        %v1370 = vshrl.u32 %v1369, 23
        %v1371 = vsub.s32 %v1370, 127
        %v1372 = vand.u32 2147483647, %v432
        %v1373 = vand.u32 %v1372, 8388607
        %v1374 = vor.u32 %v1373, 8388608
        %v1375 = vsub.s32 0, %v1374
        %v1376 = vadd.s32 %v1371, 1
        %vm1377 = vcmp.gt.s32.totalorder %v1376, 0
        %v1378 = vsel %vm1377, %v1376, 0
        %v1379 = vshrl.u32 %v1378, 5
        %v1380 = vand.u32 %v1378, 31
        %v1381 = vsub.s32 32, %v1380
        %v1382 = vshrl.u32 683565275, %v1381
        %v1383 = vshll.u32 683565275, %v1380
        %v1384 = vshrl.u32 2475754826, %v1381
        %v1385 = vor.u32 %v1383, %v1384
        %v1386 = vshll.u32 2475754826, %v1380
        %v1387 = vshrl.u32 2131351028, %v1381
        %v1388 = vor.u32 %v1386, %v1387
        %v1389 = vshll.u32 2131351028, %v1380
        %v1390 = vshrl.u32 2102212464, %v1381
        %v1391 = vor.u32 %v1389, %v1390
        %v1392 = vshll.u32 2102212464, %v1380
        %v1393 = vshrl.u32 920167782, %v1381
        %v1394 = vor.u32 %v1392, %v1393
        %v1395 = vshll.u32 920167782, %v1380
        %v1396 = vshrl.u32 1326507024, %v1381
        %v1397 = vor.u32 %v1395, %v1396
        %vm1398 = vcmp.lt.s32.totalorder %v1379, 1
        %vm1399 = vcmp.lt.s32.totalorder %v1379, 2
        %vm1400 = vcmp.lt.s32.totalorder %v1379, 3
        %vm1401 = vcmp.lt.s32.totalorder %v1379, 4
        %v1402 = vsel %vm1398, %v1382, %v1385
        %v1403 = vsel %vm1401, %v1391, 2102212464
        %v1404 = vsel %vm1400, %v1388, %v1403
        %v1405 = vsel %vm1399, %v1402, %v1404
        %v1406 = vsel %vm1398, %v1385, %v1388
        %v1407 = vsel %vm1401, %v1394, 920167782
        %v1408 = vsel %vm1400, %v1391, %v1407
        %v1409 = vsel %vm1399, %v1406, %v1408
        %v1410 = vsel %vm1398, %v1388, %v1391
        %v1411 = vsel %vm1401, %v1397, 1326507024
        %v1412 = vsel %vm1400, %v1394, %v1411
        %v1413 = vsel %vm1399, %v1410, %v1412
        %v1414 = vshll.u32 %v1374, 8
        %v1415 = vmul.u32.u64.compose %v1414, %v1413
        %v1416 = vextract.low.u32 %v1415
        %v1417 = vextract.high.u32 %v1415
        %v1418 = vmul.u32.u64.compose %v1414, %v1409
        %v1419 = vextract.low.u32 %v1418
        %v1420 = vextract.high.u32 %v1418
        %v1421 = vmul.u32 %v1414, %v1405
        %v1422 = vadd.s32 %v1417, %v1419
        %vm1423 = vc.u32 %v1417, %v1419
        %v1424 = vadd.s32 %v1420, 1
        %v1425 = vsel %vm1423, %v1424, %v1420
        %v1426 = vadd.s32 %v1421, %v1425
        %v1427 = vadd.s32 %v1426, 536870912
        %v1428 = vshrl.u32 %v1427, 30
        %v1429 = vshll.u32 %v1428, 30
        %v1430 = vsub.s32 %v1426, %v1429
        %vm1431 = vcmp.lt.s32.totalorder %v1430, 0
        %v1432 = vsub.s32 0, %v1430
        %v1433 = vsel %vm1431, %v1432, %v1430
        %v1434 = vclz %v1433
        %v1435 = vsub.s32 %v1434, 2
        %vm1436 = vcmp.gt.s32.totalorder 0, %v1435
        %v1437 = vsel %vm1436, 0, %v1435
        %v1438 = vsub.s32 32, %v1437
        %v1439 = vshll.u32 %v1430, %v1437
        %v1440 = vshrl.u32 %v1422, %v1438
        %v1441 = vor.u32 %v1439, %v1440
        %v1442 = vsub.s32 4294967266, %v1437
        %v1443 = vadd.s32 %v1442, 127
        %v1444 = vshll.u32 %v1443, 23
        %v1445 = vor.u32 4788187, %v1444
        %v1446 = vand.u32 2147483647, %v1445
        %v1448 = vcvt.s32.f32 %v1441
        %v1449 = vmul.f32 %v1448, %v1446
        %v1450 = vxor.u32 %v1449, 2147483648
        %v1451 = vsel %vm1368, %v1450, %v1449
        %v1452 = vsub.s32 4, %v1428
        %v1453 = vsel %vm1368, %v1452, %v1428
        %v1454 = vsel %vm1367, %v432, %v1451
        %v1455 = vsel %vm1367, 0, %v1453
        %v1456 = vcosq.f32.pop %v1454
        %v1457 = vsinq.f32.pop %v1454
        %vm1458 = vweird.f32 %v432
        %v1459 = vand.u32 %v1455, 3
        %vm1460 = vcmp.lt.s32.totalorder %v1459, 2
        %vm1461 = vcmp.eq.s32.totalorder %v1459, 0
        %v1462 = vxor.u32 %v1457, 2147483648
        %v1463 = vsel %vm1461, %v1456, %v1462
        %vm1464 = vcmp.eq.s32.totalorder %v1459, 2
        %v1465 = vxor.u32 %v1456, 2147483648
        %v1466 = vsel %vm1464, %v1465, %v1457
        %v1467 = vsel %vm1460, %v1463, %v1466
        %v1468 = vsel %vm1458, nan, %v1467
        %v1469 = vand.u32 2147483647, %v433
        %vm1470 = vcmp.le.f32.partialorder %v1469, 0.7853982
        %vm1471 = vcmp.lt.s32.totalorder %v433, 0
        %v1472 = vand.u32 %v433, 2139095040
        %v1473 = vshrl.u32 %v1472, 23
        %v1474 = vsub.s32 %v1473, 127
        %v1475 = vand.u32 2147483647, %v433
        %v1476 = vand.u32 %v1475, 8388607
        %v1477 = vor.u32 %v1476, 8388608
        %v1478 = vsub.s32 0, %v1477
        %v1479 = vadd.s32 %v1474, 1
        %vm1480 = vcmp.gt.s32.totalorder %v1479, 0
        %v1481 = vsel %vm1480, %v1479, 0
        %v1482 = vshrl.u32 %v1481, 5
        %v1483 = vand.u32 %v1481, 31
        %v1484 = vsub.s32 32, %v1483
        %v1485 = vshrl.u32 683565275, %v1484
        %v1486 = vshll.u32 683565275, %v1483
        %v1487 = vshrl.u32 2475754826, %v1484
        %v1488 = vor.u32 %v1486, %v1487
        %v1489 = vshll.u32 2475754826, %v1483
        %v1490 = vshrl.u32 2131351028, %v1484
        %v1491 = vor.u32 %v1489, %v1490
        %v1492 = vshll.u32 2131351028, %v1483
        %v1493 = vshrl.u32 2102212464, %v1484
        %v1494 = vor.u32 %v1492, %v1493
        %v1495 = vshll.u32 2102212464, %v1483
        %v1496 = vshrl.u32 920167782, %v1484
        %v1497 = vor.u32 %v1495, %v1496
        %v1498 = vshll.u32 920167782, %v1483
        %v1499 = vshrl.u32 1326507024, %v1484
        %v1500 = vor.u32 %v1498, %v1499
        %vm1501 = vcmp.lt.s32.totalorder %v1482, 1
        %vm1502 = vcmp.lt.s32.totalorder %v1482, 2
        %vm1503 = vcmp.lt.s32.totalorder %v1482, 3
        %vm1504 = vcmp.lt.s32.totalorder %v1482, 4
        %v1505 = vsel %vm1501, %v1485, %v1488
        %v1506 = vsel %vm1504, %v1494, 2102212464
        %v1507 = vsel %vm1503, %v1491, %v1506
        %v1508 = vsel %vm1502, %v1505, %v1507
        %v1509 = vsel %vm1501, %v1488, %v1491
        %v1510 = vsel %vm1504, %v1497, 920167782
        %v1511 = vsel %vm1503, %v1494, %v1510
        %v1512 = vsel %vm1502, %v1509, %v1511
        %v1513 = vsel %vm1501, %v1491, %v1494
        %v1514 = vsel %vm1504, %v1500, 1326507024
        %v1515 = vsel %vm1503, %v1497, %v1514
        %v1516 = vsel %vm1502, %v1513, %v1515
        %v1517 = vshll.u32 %v1477, 8
        %v1518 = vmul.u32.u64.compose %v1517, %v1516
        %v1519 = vextract.low.u32 %v1518
        %v1520 = vextract.high.u32 %v1518
        %v1521 = vmul.u32.u64.compose %v1517, %v1512
        %v1522 = vextract.low.u32 %v1521
        %v1523 = vextract.high.u32 %v1521
        %v1524 = vmul.u32 %v1517, %v1508
        %v1525 = vadd.s32 %v1520, %v1522
        %vm1526 = vc.u32 %v1520, %v1522
        %v1527 = vadd.s32 %v1523, 1
        %v1528 = vsel %vm1526, %v1527, %v1523
        %v1529 = vadd.s32 %v1524, %v1528
        %v1530 = vadd.s32 %v1529, 536870912
        %v1531 = vshrl.u32 %v1530, 30
        %v1532 = vshll.u32 %v1531, 30
        %v1533 = vsub.s32 %v1529, %v1532
        %vm1534 = vcmp.lt.s32.totalorder %v1533, 0
        %v1535 = vsub.s32 0, %v1533
        %v1536 = vsel %vm1534, %v1535, %v1533
        %v1537 = vclz %v1536
        %v1538 = vsub.s32 %v1537, 2
        %vm1539 = vcmp.gt.s32.totalorder 0, %v1538
        %v1540 = vsel %vm1539, 0, %v1538
        %v1541 = vsub.s32 32, %v1540
        %v1542 = vshll.u32 %v1533, %v1540
        %v1543 = vshrl.u32 %v1525, %v1541
        %v1544 = vor.u32 %v1542, %v1543
        %v1545 = vsub.s32 4294967266, %v1540
        %v1546 = vadd.s32 %v1545, 127
        %v1547 = vshll.u32 %v1546, 23
        %v1548 = vor.u32 4788187, %v1547
        %v1549 = vand.u32 2147483647, %v1548
        %v1551 = vcvt.s32.f32 %v1544
        %v1552 = vmul.f32 %v1551, %v1549
        %v1553 = vxor.u32 %v1552, 2147483648
        %v1554 = vsel %vm1471, %v1553, %v1552
        %v1555 = vsub.s32 4, %v1531
        %v1556 = vsel %vm1471, %v1555, %v1531
        %v1557 = vsel %vm1470, %v433, %v1554
        %v1558 = vsel %vm1470, 0, %v1556
        %v1559 = vcosq.f32.pop %v1557
        %v1560 = vsinq.f32.pop %v1557
        %vm1561 = vweird.f32 %v433
        %v1562 = vand.u32 %v1558, 3
        %vm1563 = vcmp.lt.s32.totalorder %v1562, 2
        %vm1564 = vcmp.eq.s32.totalorder %v1562, 0
        %v1565 = vxor.u32 %v1560, 2147483648
        %v1566 = vsel %vm1564, %v1559, %v1565
        %vm1567 = vcmp.eq.s32.totalorder %v1562, 2
        %v1568 = vxor.u32 %v1559, 2147483648
        %v1569 = vsel %vm1567, %v1568, %v1560
        %v1570 = vsel %vm1563, %v1566, %v1569
        %v1571 = vsel %vm1561, nan, %v1570
        %v1572 = vand.u32 2147483647, %v434
        %vm1573 = vcmp.le.f32.partialorder %v1572, 0.7853982
        %vm1574 = vcmp.lt.s32.totalorder %v434, 0
        %v1575 = vand.u32 %v434, 2139095040
        %v1576 = vshrl.u32 %v1575, 23
        %v1577 = vsub.s32 %v1576, 127
        %v1578 = vand.u32 2147483647, %v434
        %v1579 = vand.u32 %v1578, 8388607
        %v1580 = vor.u32 %v1579, 8388608
        %v1581 = vsub.s32 0, %v1580
        %v1582 = vadd.s32 %v1577, 1
        %vm1583 = vcmp.gt.s32.totalorder %v1582, 0
        %v1584 = vsel %vm1583, %v1582, 0
        %v1585 = vshrl.u32 %v1584, 5
        %v1586 = vand.u32 %v1584, 31
        %v1587 = vsub.s32 32, %v1586
        %v1588 = vshrl.u32 683565275, %v1587
        %v1589 = vshll.u32 683565275, %v1586
        %v1590 = vshrl.u32 2475754826, %v1587
        %v1591 = vor.u32 %v1589, %v1590
        %v1592 = vshll.u32 2475754826, %v1586
        %v1593 = vshrl.u32 2131351028, %v1587
        %v1594 = vor.u32 %v1592, %v1593
        %v1595 = vshll.u32 2131351028, %v1586
        %v1596 = vshrl.u32 2102212464, %v1587
        %v1597 = vor.u32 %v1595, %v1596
        %v1598 = vshll.u32 2102212464, %v1586
        %v1599 = vshrl.u32 920167782, %v1587
        %v1600 = vor.u32 %v1598, %v1599
        %v1601 = vshll.u32 920167782, %v1586
        %v1602 = vshrl.u32 1326507024, %v1587
        %v1603 = vor.u32 %v1601, %v1602
        %vm1604 = vcmp.lt.s32.totalorder %v1585, 1
        %vm1605 = vcmp.lt.s32.totalorder %v1585, 2
        %vm1606 = vcmp.lt.s32.totalorder %v1585, 3
        %vm1607 = vcmp.lt.s32.totalorder %v1585, 4
        %v1608 = vsel %vm1604, %v1588, %v1591
        %v1609 = vsel %vm1607, %v1597, 2102212464
        %v1610 = vsel %vm1606, %v1594, %v1609
        %v1611 = vsel %vm1605, %v1608, %v1610
        %v1612 = vsel %vm1604, %v1591, %v1594
        %v1613 = vsel %vm1607, %v1600, 920167782
        %v1614 = vsel %vm1606, %v1597, %v1613
        %v1615 = vsel %vm1605, %v1612, %v1614
        %v1616 = vsel %vm1604, %v1594, %v1597
        %v1617 = vsel %vm1607, %v1603, 1326507024
        %v1618 = vsel %vm1606, %v1600, %v1617
        %v1619 = vsel %vm1605, %v1616, %v1618
        %v1620 = vshll.u32 %v1580, 8
        %v1621 = vmul.u32.u64.compose %v1620, %v1619
        %v1622 = vextract.low.u32 %v1621
        %v1623 = vextract.high.u32 %v1621
        %v1624 = vmul.u32.u64.compose %v1620, %v1615
        %v1625 = vextract.low.u32 %v1624
        %v1626 = vextract.high.u32 %v1624
        %v1627 = vmul.u32 %v1620, %v1611
        %v1628 = vadd.s32 %v1623, %v1625
        %vm1629 = vc.u32 %v1623, %v1625
        %v1630 = vadd.s32 %v1626, 1
        %v1631 = vsel %vm1629, %v1630, %v1626
        %v1632 = vadd.s32 %v1627, %v1631
        %v1633 = vadd.s32 %v1632, 536870912
        %v1634 = vshrl.u32 %v1633, 30
        %v1635 = vshll.u32 %v1634, 30
        %v1636 = vsub.s32 %v1632, %v1635
        %vm1637 = vcmp.lt.s32.totalorder %v1636, 0
        %v1638 = vsub.s32 0, %v1636
        %v1639 = vsel %vm1637, %v1638, %v1636
        %v1640 = vclz %v1639
        %v1641 = vsub.s32 %v1640, 2
        %vm1642 = vcmp.gt.s32.totalorder 0, %v1641
        %v1643 = vsel %vm1642, 0, %v1641
        %v1644 = vsub.s32 32, %v1643
        %v1645 = vshll.u32 %v1636, %v1643
        %v1646 = vshrl.u32 %v1628, %v1644
        %v1647 = vor.u32 %v1645, %v1646
        %v1648 = vsub.s32 4294967266, %v1643
        %v1649 = vadd.s32 %v1648, 127
        %v1650 = vshll.u32 %v1649, 23
        %v1651 = vor.u32 4788187, %v1650
        %v1652 = vand.u32 2147483647, %v1651
        %v1654 = vcvt.s32.f32 %v1647
        %v1655 = vmul.f32 %v1654, %v1652
        %v1656 = vxor.u32 %v1655, 2147483648
        %v1657 = vsel %vm1574, %v1656, %v1655
        %v1658 = vsub.s32 4, %v1634
        %v1659 = vsel %vm1574, %v1658, %v1634
        %v1660 = vsel %vm1573, %v434, %v1657
        %v1661 = vsel %vm1573, 0, %v1659
        %v1662 = vcosq.f32.pop %v1660
        %v1663 = vsinq.f32.pop %v1660
        %vm1664 = vweird.f32 %v434
        %v1665 = vand.u32 %v1661, 3
        %vm1666 = vcmp.lt.s32.totalorder %v1665, 2
        %vm1667 = vcmp.eq.s32.totalorder %v1665, 0
        %v1668 = vxor.u32 %v1663, 2147483648
        %v1669 = vsel %vm1667, %v1662, %v1668
        %vm1670 = vcmp.eq.s32.totalorder %v1665, 2
        %v1671 = vxor.u32 %v1662, 2147483648
        %v1672 = vsel %vm1670, %v1671, %v1663
        %v1673 = vsel %vm1666, %v1669, %v1672
        %v1674 = vsel %vm1664, nan, %v1673
        %v1675 = vand.u32 2147483647, %v435
        %vm1676 = vcmp.le.f32.partialorder %v1675, 0.7853982
        %vm1677 = vcmp.lt.s32.totalorder %v435, 0
        %v1678 = vand.u32 %v435, 2139095040
        %v1679 = vshrl.u32 %v1678, 23
        %v1680 = vsub.s32 %v1679, 127
        %v1681 = vand.u32 2147483647, %v435
        %v1682 = vand.u32 %v1681, 8388607
        %v1683 = vor.u32 %v1682, 8388608
        %v1684 = vsub.s32 0, %v1683
        %v1685 = vadd.s32 %v1680, 1
        %vm1686 = vcmp.gt.s32.totalorder %v1685, 0
        %v1687 = vsel %vm1686, %v1685, 0
        %v1688 = vshrl.u32 %v1687, 5
        %v1689 = vand.u32 %v1687, 31
        %v1690 = vsub.s32 32, %v1689
        %v1691 = vshrl.u32 683565275, %v1690
        %v1692 = vshll.u32 683565275, %v1689
        %v1693 = vshrl.u32 2475754826, %v1690
        %v1694 = vor.u32 %v1692, %v1693
        %v1695 = vshll.u32 2475754826, %v1689
        %v1696 = vshrl.u32 2131351028, %v1690
        %v1697 = vor.u32 %v1695, %v1696
        %v1698 = vshll.u32 2131351028, %v1689
        %v1699 = vshrl.u32 2102212464, %v1690
        %v1700 = vor.u32 %v1698, %v1699
        %v1701 = vshll.u32 2102212464, %v1689
        %v1702 = vshrl.u32 920167782, %v1690
        %v1703 = vor.u32 %v1701, %v1702
        %v1704 = vshll.u32 920167782, %v1689
        %v1705 = vshrl.u32 1326507024, %v1690
        %v1706 = vor.u32 %v1704, %v1705
        %vm1707 = vcmp.lt.s32.totalorder %v1688, 1
        %vm1708 = vcmp.lt.s32.totalorder %v1688, 2
        %vm1709 = vcmp.lt.s32.totalorder %v1688, 3
        %vm1710 = vcmp.lt.s32.totalorder %v1688, 4
        %v1711 = vsel %vm1707, %v1691, %v1694
        %v1712 = vsel %vm1710, %v1700, 2102212464
        %v1713 = vsel %vm1709, %v1697, %v1712
        %v1714 = vsel %vm1708, %v1711, %v1713
        %v1715 = vsel %vm1707, %v1694, %v1697
        %v1716 = vsel %vm1710, %v1703, 920167782
        %v1717 = vsel %vm1709, %v1700, %v1716
        %v1718 = vsel %vm1708, %v1715, %v1717
        %v1719 = vsel %vm1707, %v1697, %v1700
        %v1720 = vsel %vm1710, %v1706, 1326507024
        %v1721 = vsel %vm1709, %v1703, %v1720
        %v1722 = vsel %vm1708, %v1719, %v1721
        %v1723 = vshll.u32 %v1683, 8
        %v1724 = vmul.u32.u64.compose %v1723, %v1722
        %v1725 = vextract.low.u32 %v1724
        %v1726 = vextract.high.u32 %v1724
        %v1727 = vmul.u32.u64.compose %v1723, %v1718
        %v1728 = vextract.low.u32 %v1727
        %v1729 = vextract.high.u32 %v1727
        %v1730 = vmul.u32 %v1723, %v1714
        %v1731 = vadd.s32 %v1726, %v1728
        %vm1732 = vc.u32 %v1726, %v1728
        %v1733 = vadd.s32 %v1729, 1
        %v1734 = vsel %vm1732, %v1733, %v1729
        %v1735 = vadd.s32 %v1730, %v1734
        %v1736 = vadd.s32 %v1735, 536870912
        %v1737 = vshrl.u32 %v1736, 30
        %v1738 = vshll.u32 %v1737, 30
        %v1739 = vsub.s32 %v1735, %v1738
        %vm1740 = vcmp.lt.s32.totalorder %v1739, 0
        %v1741 = vsub.s32 0, %v1739
        %v1742 = vsel %vm1740, %v1741, %v1739
        %v1743 = vclz %v1742
        %v1744 = vsub.s32 %v1743, 2
        %vm1745 = vcmp.gt.s32.totalorder 0, %v1744
        %v1746 = vsel %vm1745, 0, %v1744
        %v1747 = vsub.s32 32, %v1746
        %v1748 = vshll.u32 %v1739, %v1746
        %v1749 = vshrl.u32 %v1731, %v1747
        %v1750 = vor.u32 %v1748, %v1749
        %v1751 = vsub.s32 4294967266, %v1746
        %v1752 = vadd.s32 %v1751, 127
        %v1753 = vshll.u32 %v1752, 23
        %v1754 = vor.u32 4788187, %v1753
        %v1755 = vand.u32 2147483647, %v1754
        %v1757 = vcvt.s32.f32 %v1750
        %v1758 = vmul.f32 %v1757, %v1755
        %v1759 = vxor.u32 %v1758, 2147483648
        %v1760 = vsel %vm1677, %v1759, %v1758
        %v1761 = vsub.s32 4, %v1737
        %v1762 = vsel %vm1677, %v1761, %v1737
        %v1763 = vsel %vm1676, %v435, %v1760
        %v1764 = vsel %vm1676, 0, %v1762
        %v1765 = vcosq.f32.pop %v1763
        %v1766 = vsinq.f32.pop %v1763
        %vm1767 = vweird.f32 %v435
        %v1768 = vand.u32 %v1764, 3
        %vm1769 = vcmp.lt.s32.totalorder %v1768, 2
        %vm1770 = vcmp.eq.s32.totalorder %v1768, 0
        %v1771 = vxor.u32 %v1766, 2147483648
        %v1772 = vsel %vm1770, %v1765, %v1771
        %vm1773 = vcmp.eq.s32.totalorder %v1768, 2
        %v1774 = vxor.u32 %v1765, 2147483648
        %v1775 = vsel %vm1773, %v1774, %v1766
        %v1776 = vsel %vm1769, %v1772, %v1775
        %v1777 = vsel %vm1767, nan, %v1776
        %v1778 = vand.u32 2147483647, %v436
        %vm1779 = vcmp.le.f32.partialorder %v1778, 0.7853982
        %vm1780 = vcmp.lt.s32.totalorder %v436, 0
        %v1781 = vand.u32 %v436, 2139095040
        %v1782 = vshrl.u32 %v1781, 23
        %v1783 = vsub.s32 %v1782, 127
        %v1784 = vand.u32 2147483647, %v436
        %v1785 = vand.u32 %v1784, 8388607
        %v1786 = vor.u32 %v1785, 8388608
        %v1787 = vsub.s32 0, %v1786
        %v1788 = vadd.s32 %v1783, 1
        %vm1789 = vcmp.gt.s32.totalorder %v1788, 0
        %v1790 = vsel %vm1789, %v1788, 0
        %v1791 = vshrl.u32 %v1790, 5
        %v1792 = vand.u32 %v1790, 31
        %v1793 = vsub.s32 32, %v1792
        %v1794 = vshrl.u32 683565275, %v1793
        %v1795 = vshll.u32 683565275, %v1792
        %v1796 = vshrl.u32 2475754826, %v1793
        %v1797 = vor.u32 %v1795, %v1796
        %v1798 = vshll.u32 2475754826, %v1792
        %v1799 = vshrl.u32 2131351028, %v1793
        %v1800 = vor.u32 %v1798, %v1799
        %v1801 = vshll.u32 2131351028, %v1792
        %v1802 = vshrl.u32 2102212464, %v1793
        %v1803 = vor.u32 %v1801, %v1802
        %v1804 = vshll.u32 2102212464, %v1792
        %v1805 = vshrl.u32 920167782, %v1793
        %v1806 = vor.u32 %v1804, %v1805
        %v1807 = vshll.u32 920167782, %v1792
        %v1808 = vshrl.u32 1326507024, %v1793
        %v1809 = vor.u32 %v1807, %v1808
        %vm1810 = vcmp.lt.s32.totalorder %v1791, 1
        %vm1811 = vcmp.lt.s32.totalorder %v1791, 2
        %vm1812 = vcmp.lt.s32.totalorder %v1791, 3
        %vm1813 = vcmp.lt.s32.totalorder %v1791, 4
        %v1814 = vsel %vm1810, %v1794, %v1797
        %v1815 = vsel %vm1813, %v1803, 2102212464
        %v1816 = vsel %vm1812, %v1800, %v1815
        %v1817 = vsel %vm1811, %v1814, %v1816
        %v1818 = vsel %vm1810, %v1797, %v1800
        %v1819 = vsel %vm1813, %v1806, 920167782
        %v1820 = vsel %vm1812, %v1803, %v1819
        %v1821 = vsel %vm1811, %v1818, %v1820
        %v1822 = vsel %vm1810, %v1800, %v1803
        %v1823 = vsel %vm1813, %v1809, 1326507024
        %v1824 = vsel %vm1812, %v1806, %v1823
        %v1825 = vsel %vm1811, %v1822, %v1824
        %v1826 = vshll.u32 %v1786, 8
        %v1827 = vmul.u32.u64.compose %v1826, %v1825
        %v1828 = vextract.low.u32 %v1827
        %v1829 = vextract.high.u32 %v1827
        %v1830 = vmul.u32.u64.compose %v1826, %v1821
        %v1831 = vextract.low.u32 %v1830
        %v1832 = vextract.high.u32 %v1830
        %v1833 = vmul.u32 %v1826, %v1817
        %v1834 = vadd.s32 %v1829, %v1831
        %vm1835 = vc.u32 %v1829, %v1831
        %v1836 = vadd.s32 %v1832, 1
        %v1837 = vsel %vm1835, %v1836, %v1832
        %v1838 = vadd.s32 %v1833, %v1837
        %v1839 = vadd.s32 %v1838, 536870912
        %v1840 = vshrl.u32 %v1839, 30
        %v1841 = vshll.u32 %v1840, 30
        %v1842 = vsub.s32 %v1838, %v1841
        %vm1843 = vcmp.lt.s32.totalorder %v1842, 0
        %v1844 = vsub.s32 0, %v1842
        %v1845 = vsel %vm1843, %v1844, %v1842
        %v1846 = vclz %v1845
        %v1847 = vsub.s32 %v1846, 2
        %vm1848 = vcmp.gt.s32.totalorder 0, %v1847
        %v1849 = vsel %vm1848, 0, %v1847
        %v1850 = vsub.s32 32, %v1849
        %v1851 = vshll.u32 %v1842, %v1849
        %v1852 = vshrl.u32 %v1834, %v1850
        %v1853 = vor.u32 %v1851, %v1852
        %v1854 = vsub.s32 4294967266, %v1849
        %v1855 = vadd.s32 %v1854, 127
        %v1856 = vshll.u32 %v1855, 23
        %v1857 = vor.u32 4788187, %v1856
        %v1858 = vand.u32 2147483647, %v1857
        %v1860 = vcvt.s32.f32 %v1853
        %v1861 = vmul.f32 %v1860, %v1858
        %v1862 = vxor.u32 %v1861, 2147483648
        %v1863 = vsel %vm1780, %v1862, %v1861
        %v1864 = vsub.s32 4, %v1840
        %v1865 = vsel %vm1780, %v1864, %v1840
        %v1866 = vsel %vm1779, %v436, %v1863
        %v1867 = vsel %vm1779, 0, %v1865
        %v1868 = vcosq.f32.pop %v1866
        %v1869 = vsinq.f32.pop %v1866
        %vm1870 = vweird.f32 %v436
        %v1871 = vand.u32 %v1867, 3
        %vm1872 = vcmp.lt.s32.totalorder %v1871, 2
        %vm1873 = vcmp.eq.s32.totalorder %v1871, 0
        %v1874 = vxor.u32 %v1869, 2147483648
        %v1875 = vsel %vm1873, %v1868, %v1874
        %vm1876 = vcmp.eq.s32.totalorder %v1871, 2
        %v1877 = vxor.u32 %v1868, 2147483648
        %v1878 = vsel %vm1876, %v1877, %v1869
        %v1879 = vsel %vm1872, %v1875, %v1878
        %v1880 = vsel %vm1870, nan, %v1879
        %v1881 = vand.u32 2147483647, %v437
        %vm1882 = vcmp.le.f32.partialorder %v1881, 0.7853982
        %vm1883 = vcmp.lt.s32.totalorder %v437, 0
        %v1884 = vand.u32 %v437, 2139095040
        %v1885 = vshrl.u32 %v1884, 23
        %v1886 = vsub.s32 %v1885, 127
        %v1887 = vand.u32 2147483647, %v437
        %v1888 = vand.u32 %v1887, 8388607
        %v1889 = vor.u32 %v1888, 8388608
        %v1890 = vsub.s32 0, %v1889
        %v1891 = vadd.s32 %v1886, 1
        %vm1892 = vcmp.gt.s32.totalorder %v1891, 0
        %v1893 = vsel %vm1892, %v1891, 0
        %v1894 = vshrl.u32 %v1893, 5
        %v1895 = vand.u32 %v1893, 31
        %v1896 = vsub.s32 32, %v1895
        %v1897 = vshrl.u32 683565275, %v1896
        %v1898 = vshll.u32 683565275, %v1895
        %v1899 = vshrl.u32 2475754826, %v1896
        %v1900 = vor.u32 %v1898, %v1899
        %v1901 = vshll.u32 2475754826, %v1895
        %v1902 = vshrl.u32 2131351028, %v1896
        %v1903 = vor.u32 %v1901, %v1902
        %v1904 = vshll.u32 2131351028, %v1895
        %v1905 = vshrl.u32 2102212464, %v1896
        %v1906 = vor.u32 %v1904, %v1905
        %v1907 = vshll.u32 2102212464, %v1895
        %v1908 = vshrl.u32 920167782, %v1896
        %v1909 = vor.u32 %v1907, %v1908
        %v1910 = vshll.u32 920167782, %v1895
        %v1911 = vshrl.u32 1326507024, %v1896
        %v1912 = vor.u32 %v1910, %v1911
        %vm1913 = vcmp.lt.s32.totalorder %v1894, 1
        %vm1914 = vcmp.lt.s32.totalorder %v1894, 2
        %vm1915 = vcmp.lt.s32.totalorder %v1894, 3
        %vm1916 = vcmp.lt.s32.totalorder %v1894, 4
        %v1917 = vsel %vm1913, %v1897, %v1900
        %v1918 = vsel %vm1916, %v1906, 2102212464
        %v1919 = vsel %vm1915, %v1903, %v1918
        %v1920 = vsel %vm1914, %v1917, %v1919
        %v1921 = vsel %vm1913, %v1900, %v1903
        %v1922 = vsel %vm1916, %v1909, 920167782
        %v1923 = vsel %vm1915, %v1906, %v1922
        %v1924 = vsel %vm1914, %v1921, %v1923
        %v1925 = vsel %vm1913, %v1903, %v1906
        %v1926 = vsel %vm1916, %v1912, 1326507024
        %v1927 = vsel %vm1915, %v1909, %v1926
        %v1928 = vsel %vm1914, %v1925, %v1927
        %v1929 = vshll.u32 %v1889, 8
        %v1930 = vmul.u32.u64.compose %v1929, %v1928
        %v1931 = vextract.low.u32 %v1930
        %v1932 = vextract.high.u32 %v1930
        %v1933 = vmul.u32.u64.compose %v1929, %v1924
        %v1934 = vextract.low.u32 %v1933
        %v1935 = vextract.high.u32 %v1933
        %v1936 = vmul.u32 %v1929, %v1920
        %v1937 = vadd.s32 %v1932, %v1934
        %vm1938 = vc.u32 %v1932, %v1934
        %v1939 = vadd.s32 %v1935, 1
        %v1940 = vsel %vm1938, %v1939, %v1935
        %v1941 = vadd.s32 %v1936, %v1940
        %v1942 = vadd.s32 %v1941, 536870912
        %v1943 = vshrl.u32 %v1942, 30
        %v1944 = vshll.u32 %v1943, 30
        %v1945 = vsub.s32 %v1941, %v1944
        %vm1946 = vcmp.lt.s32.totalorder %v1945, 0
        %v1947 = vsub.s32 0, %v1945
        %v1948 = vsel %vm1946, %v1947, %v1945
        %v1949 = vclz %v1948
        %v1950 = vsub.s32 %v1949, 2
        %vm1951 = vcmp.gt.s32.totalorder 0, %v1950
        %v1952 = vsel %vm1951, 0, %v1950
        %v1953 = vsub.s32 32, %v1952
        %v1954 = vshll.u32 %v1945, %v1952
        %v1955 = vshrl.u32 %v1937, %v1953
        %v1956 = vor.u32 %v1954, %v1955
        %v1957 = vsub.s32 4294967266, %v1952
        %v1958 = vadd.s32 %v1957, 127
        %v1959 = vshll.u32 %v1958, 23
        %v1960 = vor.u32 4788187, %v1959
        %v1961 = vand.u32 2147483647, %v1960
        %v1963 = vcvt.s32.f32 %v1956
        %v1964 = vmul.f32 %v1963, %v1961
        %v1965 = vxor.u32 %v1964, 2147483648
        %v1966 = vsel %vm1883, %v1965, %v1964
        %v1967 = vsub.s32 4, %v1943
        %v1968 = vsel %vm1883, %v1967, %v1943
        %v1969 = vsel %vm1882, %v437, %v1966
        %v1970 = vsel %vm1882, 0, %v1968
        %v1971 = vcosq.f32.pop %v1969
        %v1972 = vsinq.f32.pop %v1969
        %vm1973 = vweird.f32 %v437
        %v1974 = vand.u32 %v1970, 3
        %vm1975 = vcmp.lt.s32.totalorder %v1974, 2
        %vm1976 = vcmp.eq.s32.totalorder %v1974, 0
        %v1977 = vxor.u32 %v1972, 2147483648
        %v1978 = vsel %vm1976, %v1971, %v1977
        %vm1979 = vcmp.eq.s32.totalorder %v1974, 2
        %v1980 = vxor.u32 %v1971, 2147483648
        %v1981 = vsel %vm1979, %v1980, %v1972
        %v1982 = vsel %vm1975, %v1978, %v1981
        %v1983 = vsel %vm1973, nan, %v1982
        %v1984 = vand.u32 2147483647, %v438
        %vm1985 = vcmp.le.f32.partialorder %v1984, 0.7853982
        %vm1986 = vcmp.lt.s32.totalorder %v438, 0
        %v1987 = vand.u32 %v438, 2139095040
        %v1988 = vshrl.u32 %v1987, 23
        %v1989 = vsub.s32 %v1988, 127
        %v1990 = vand.u32 2147483647, %v438
        %v1991 = vand.u32 %v1990, 8388607
        %v1992 = vor.u32 %v1991, 8388608
        %v1993 = vsub.s32 0, %v1992
        %v1994 = vadd.s32 %v1989, 1
        %vm1995 = vcmp.gt.s32.totalorder %v1994, 0
        %v1996 = vsel %vm1995, %v1994, 0
        %v1997 = vshrl.u32 %v1996, 5
        %v1998 = vand.u32 %v1996, 31
        %v1999 = vsub.s32 32, %v1998
        %v2000 = vshrl.u32 683565275, %v1999
        %v2001 = vshll.u32 683565275, %v1998
        %v2002 = vshrl.u32 2475754826, %v1999
        %v2003 = vor.u32 %v2001, %v2002
        %v2004 = vshll.u32 2475754826, %v1998
        %v2005 = vshrl.u32 2131351028, %v1999
        %v2006 = vor.u32 %v2004, %v2005
        %v2007 = vshll.u32 2131351028, %v1998
        %v2008 = vshrl.u32 2102212464, %v1999
        %v2009 = vor.u32 %v2007, %v2008
        %v2010 = vshll.u32 2102212464, %v1998
        %v2011 = vshrl.u32 920167782, %v1999
        %v2012 = vor.u32 %v2010, %v2011
        %v2013 = vshll.u32 920167782, %v1998
        %v2014 = vshrl.u32 1326507024, %v1999
        %v2015 = vor.u32 %v2013, %v2014
        %vm2016 = vcmp.lt.s32.totalorder %v1997, 1
        %vm2017 = vcmp.lt.s32.totalorder %v1997, 2
        %vm2018 = vcmp.lt.s32.totalorder %v1997, 3
        %vm2019 = vcmp.lt.s32.totalorder %v1997, 4
        %v2020 = vsel %vm2016, %v2000, %v2003
        %v2021 = vsel %vm2019, %v2009, 2102212464
        %v2022 = vsel %vm2018, %v2006, %v2021
        %v2023 = vsel %vm2017, %v2020, %v2022
        %v2024 = vsel %vm2016, %v2003, %v2006
        %v2025 = vsel %vm2019, %v2012, 920167782
        %v2026 = vsel %vm2018, %v2009, %v2025
        %v2027 = vsel %vm2017, %v2024, %v2026
        %v2028 = vsel %vm2016, %v2006, %v2009
        %v2029 = vsel %vm2019, %v2015, 1326507024
        %v2030 = vsel %vm2018, %v2012, %v2029
        %v2031 = vsel %vm2017, %v2028, %v2030
        %v2032 = vshll.u32 %v1992, 8
        %v2033 = vmul.u32.u64.compose %v2032, %v2031
        %v2034 = vextract.low.u32 %v2033
        %v2035 = vextract.high.u32 %v2033
        %v2036 = vmul.u32.u64.compose %v2032, %v2027
        %v2037 = vextract.low.u32 %v2036
        %v2038 = vextract.high.u32 %v2036
        %v2039 = vmul.u32 %v2032, %v2023
        %v2040 = vadd.s32 %v2035, %v2037
        %vm2041 = vc.u32 %v2035, %v2037
        %v2042 = vadd.s32 %v2038, 1
        %v2043 = vsel %vm2041, %v2042, %v2038
        %v2044 = vadd.s32 %v2039, %v2043
        %v2045 = vadd.s32 %v2044, 536870912
        %v2046 = vshrl.u32 %v2045, 30
        %v2047 = vshll.u32 %v2046, 30
        %v2048 = vsub.s32 %v2044, %v2047
        %vm2049 = vcmp.lt.s32.totalorder %v2048, 0
        %v2050 = vsub.s32 0, %v2048
        %v2051 = vsel %vm2049, %v2050, %v2048
        %v2052 = vclz %v2051
        %v2053 = vsub.s32 %v2052, 2
        %vm2054 = vcmp.gt.s32.totalorder 0, %v2053
        %v2055 = vsel %vm2054, 0, %v2053
        %v2056 = vsub.s32 32, %v2055
        %v2057 = vshll.u32 %v2048, %v2055
        %v2058 = vshrl.u32 %v2040, %v2056
        %v2059 = vor.u32 %v2057, %v2058
        %v2060 = vsub.s32 4294967266, %v2055
        %v2061 = vadd.s32 %v2060, 127
        %v2062 = vshll.u32 %v2061, 23
        %v2063 = vor.u32 4788187, %v2062
        %v2064 = vand.u32 2147483647, %v2063
        %v2066 = vcvt.s32.f32 %v2059
        %v2067 = vmul.f32 %v2066, %v2064
        %v2068 = vxor.u32 %v2067, 2147483648
        %v2069 = vsel %vm1986, %v2068, %v2067
        %v2070 = vsub.s32 4, %v2046
        %v2071 = vsel %vm1986, %v2070, %v2046
        %v2072 = vsel %vm1985, %v438, %v2069
        %v2073 = vsel %vm1985, 0, %v2071
        %v2074 = vcosq.f32.pop %v2072
        %v2075 = vsinq.f32.pop %v2072
        %vm2076 = vweird.f32 %v438
        %v2077 = vand.u32 %v2073, 3
        %vm2078 = vcmp.lt.s32.totalorder %v2077, 2
        %vm2079 = vcmp.eq.s32.totalorder %v2077, 0
        %v2080 = vxor.u32 %v2075, 2147483648
        %v2081 = vsel %vm2079, %v2074, %v2080
        %vm2082 = vcmp.eq.s32.totalorder %v2077, 2
        %v2083 = vxor.u32 %v2074, 2147483648
        %v2084 = vsel %vm2082, %v2083, %v2075
        %v2085 = vsel %vm2078, %v2081, %v2084
        %v2086 = vsel %vm2076, nan, %v2085
        %v2087 = vmul.f32 %v541, 0.033333335
        %v2088 = vmul.f32 %v644, 0.033333335
        %v2089 = vmul.f32 %v747, 0.033333335
        %v2090 = vmul.f32 %v850, 0.033333335
        %v2091 = vmul.f32 %v953, 0.033333335
        %v2092 = vmul.f32 %v1056, 0.033333335
        %v2093 = vmul.f32 %v1159, 0.033333335
        %v2094 = vmul.f32 %v1262, 0.033333335
        %v2095 = vmul.f32 %v1365, 0.033333335
        %v2096 = vmul.f32 %v1468, 0.033333335
        %v2097 = vmul.f32 %v1571, 0.033333335
        %v2098 = vmul.f32 %v1674, 0.033333335
        %v2099 = vmul.f32 %v1777, 0.033333335
        %v2100 = vmul.f32 %v1880, 0.033333335
        %v2101 = vmul.f32 %v1983, 0.033333335
        %v2102 = vmul.f32 %v2086, 0.033333335
        %v2103 = vsub.f32 %v345, %v2087
        %v2104 = vsub.f32 %v350, %v2088
        %v2105 = vsub.f32 %v355, %v2089
        %v2106 = vsub.f32 %v360, %v2090
        %v2107 = vsub.f32 %v365, %v2091
        %v2108 = vsub.f32 %v370, %v2092
        %v2109 = vsub.f32 %v375, %v2093
        %v2110 = vsub.f32 %v380, %v2094
        %v2111 = vsub.f32 %v385, %v2095
        %v2112 = vsub.f32 %v390, %v2096
        %v2113 = vsub.f32 %v395, %v2097
        %v2114 = vsub.f32 %v400, %v2098
        %v2115 = vsub.f32 %v405, %v2099
        %v2116 = vsub.f32 %v410, %v2100
        %v2117 = vsub.f32 %v415, %v2101
        %v2118 = vsub.f32 %v420, %v2102
        %v2119 = vadd.f32 %v2103, 0.033333335
        %v2120 = vadd.f32 %v2104, 0.033333335
        %v2121 = vadd.f32 %v2105, 0.033333335
        %v2122 = vadd.f32 %v2106, 0.033333335
        %v2123 = vadd.f32 %v2107, 0.033333335
        %v2124 = vadd.f32 %v2108, 0.033333335
        %v2125 = vadd.f32 %v2109, 0.033333335
        %v2126 = vadd.f32 %v2110, 0.033333335
        %v2127 = vadd.f32 %v2111, 0.033333335
        %v2128 = vadd.f32 %v2112, 0.033333335
        %v2129 = vadd.f32 %v2113, 0.033333335
        %v2130 = vadd.f32 %v2114, 0.033333335
        %v2131 = vadd.f32 %v2115, 0.033333335
        %v2132 = vadd.f32 %v2116, 0.033333335
        %v2133 = vadd.f32 %v2117, 0.033333335
        %v2134 = vadd.f32 %v2118, 0.033333335
        %2135 = vst [vmem:[%s204] sm:$0xff] %v2119
        %2136 = vst [vmem:[%s204 + $0x8] sm:$0xff] %v2120
        %2137 = vst [vmem:[%s204 + $0x10] sm:$0xff] %v2121
        %2138 = vst [vmem:[%s204 + $0x18] sm:$0xff] %v2122
        %2139 = vst [vmem:[%s204 + $0x20] sm:$0xff] %v2123
        %2140 = vst [vmem:[%s204 + $0x28] sm:$0xff] %v2124
        %2141 = vst [vmem:[%s204 + $0x30] sm:$0xff] %v2125
        %2142 = vst [vmem:[%s204 + $0x38] sm:$0xff] %v2126
        %2143 = vst [vmem:[%s204 + $0x40] sm:$0xff] %v2127
        %2144 = vst [vmem:[%s204 + $0x48] sm:$0xff] %v2128
        %2145 = vst [vmem:[%s204 + $0x50] sm:$0xff] %v2129
        %2146 = vst [vmem:[%s204 + $0x58] sm:$0xff] %v2130
        %2147 = vst [vmem:[%s204 + $0x60] sm:$0xff] %v2131
        %2148 = vst [vmem:[%s204 + $0x68] sm:$0xff] %v2132
        %2149 = vst [vmem:[%s204 + $0x70] sm:$0xff] %v2133
        %2150 = vst [vmem:[%s204 + $0x78] sm:$0xff] %v2134
        %s2151 = sand.u32 %s97, 1
        %s2152 = scalar_lea.sflag [#allocation4], %s2151
        %s2153 = sand.u32 %s97, 1
        %s2154 = smul.addr %s2153, 128
        %s2155 = scalar_lea.vmem [#allocation7], %s2154
        // Predicated region
        $region41: #{tpu_custom_call.1} parent=31 // pred_check
          %p2156 = pneg %p107
        $region42: #{tpu_custom_call.1} parent=31 // pred_check_branch
          %2158 = sbr.rel (%p2156) target = $region44
        $region43: #{tpu_custom_call.1} parent=31 // pred_region
          %s2159 = smul.u32 16, %s21
          %s2161 = ssub.s32 2048, 2048
          %2162 = vsyncadd %s2152, %s2161
          %s2163 = smul.addr %s2159, 128
          %s2164 = scalar_lea.hbm %s3, %s2163
          %s2165 = sshll.u32 %s2155, 4
          %s2166 = int_to_ptr.vmem [resolvable:$true] %s2165
          %2171 = dma.vmem_to_hbm [thread:$0]  %s2166, 2048, %s2164, %s2152, 128, 128, 8
        $region44: #{tpu_custom_call.1} parent=31 // pred_fallthru
          _
      $region32: #{tpu_custom_call.1} parent=5 // pred_fallthru
        _
      %p2172 = scmp.le.s32.totalorder 2, %s16
      // Predicated region
      $region45: #{tpu_custom_call.1} parent=5 // pred_check
        %p2173 = pneg %p2172
      $region46: #{tpu_custom_call.1} parent=5 // pred_check_branch
        %2175 = sbr.rel (%p2173) target = $region48
      $region47: #{tpu_custom_call.1} parent=5 // pred_region
        %s2176 = ssub.s32 %s16, 2
        // Predicated region
        $region49: #{tpu_custom_call.1} parent=47 // pred_check
          %p2177 = pneg %p113
        $region50: #{tpu_custom_call.1} parent=47 // pred_check_branch
          %2179 = sbr.rel (%p2177) target = $region52
        $region51: #{tpu_custom_call.1} parent=47 // pred_region
          %s2180 = sand.u32 %s98, 1
          %s2181 = scalar_lea.sflag [#allocation4], %s2180
          %s2182 = sand.u32 %s98, 1
          %s2183 = smul.addr %s2182, 128
          %s2184 = scalar_lea.vmem [#allocation7], %s2183
          %2185 = dma.done %s2181, 2048
        $region52: #{tpu_custom_call.1} parent=47 // pred_fallthru
          _
      $region48: #{tpu_custom_call.1} parent=5 // pred_fallthru
        _
    $region6: #{tpu_custom_call.1} parent=1 // loop_footer
      %s20 = sadd.s32 1, %s16
    $region7: #{tpu_custom_call.1} parent=1 // loop_footer_branch
      %15 = sbr.rel target = $region3
    $region8: #{tpu_custom_call.1} parent=1 // loop_exit
      _
    %2186 = vsyncpa [#allocation3], 1
    %s2187 = scalar_lea.sflag [#allocation3], 1
    %2188 = vsyncpa %s2187, 1
    %2189 = vsyncpa [#allocation6], 1
    %2190 = vsyncpa [#allocation4], 1
    %s2191 = scalar_lea.sflag [#allocation4], 1
    %2192 = vsyncpa %s2191, 1

</llo_original>
